<compile_context>
chip_gen: v7x
topology: tpu7x:2x2x1
jax: 0.10.0
libtpu: 0.0.40
codegen_flags: <defaults>
</compile_context>

<pallas_src>
import jax
import jax.numpy as jnp
from jax.experimental import pallas as pl
from jax.experimental.pallas import tpu as pltpu

# ---- model hyper-params (Network.__init__ equivalents, kept small) ----
IN_CH = 16           # input_channels
HIDDEN = 32          # hidden_dim
OUT_CH = 8           # output_channels
N_HIDDEN_LAYERS = 1  # n_hidden_layers
DROPOUT_RATE = 0.0   # identity in forward (eval mode)
# TODO(synk): training-mode dropout (rate > 0) is not implemented in the kernel.

# ---- TPU layout constants ----
LANE = 128
HID_PAD = max(LANE, ((HIDDEN + LANE - 1) // LANE) * LANE)  # 128 (hidden lanes only)
BATCH_TILE = 512                                           # rows per grid step


def mlp_kernel(x_ref, w1_ref, b1_ref, wh_ref, bh_ref, w3_ref, b3_ref, o_ref):
    """fc1 -> relu -> (hidden -> relu)*N -> fc3 for one BATCH_TILE-row tile.

    x streams at its true 16-lane width (K=16 matmul), the hidden activations
    live lane-padded (128) only inside vregs/VMEM, and the final store writes
    only the OUT_CH real columns.  Zero-padded hidden columns stay exactly zero
    through every layer (zero weights / zero bias / relu(0) == 0).
    """
    x = x_ref[...]                                                   # (TILE, 16)

    # fc1 + relu  -> (TILE, HID_PAD)
    h = jnp.dot(x, w1_ref[...], preferred_element_type=jnp.float32) + b1_ref[...]
    h = jnp.maximum(h, 0.0)

    # hidden layers (unrolled at trace time) + relu
    for l in range(N_HIDDEN_LAYERS):
        h = jnp.dot(h, wh_ref[l], preferred_element_type=jnp.float32) + bh_ref[l]
        h = jnp.maximum(h, 0.0)

    # fc3 (no activation); true-width (TILE, OUT_CH) store
    o_ref[...] = (
        jnp.dot(h, w3_ref[...], preferred_element_type=jnp.float32) + b3_ref[...]
    ).astype(o_ref.dtype)


@jax.jit
def network_forward(x, w1p, b1p, whp, bhp, w3p, b3p):
    """x: [B, IN_CH].  Params are pre-shaped for the kernel (see init_params)."""
    B = x.shape[0]
    rem = B % BATCH_TILE
    if rem != 0:
        # Row-pad only (no column padding; x streams at true width).
        x = jnp.pad(x, ((0, BATCH_TILE - rem), (0, 0)))
    Bp = x.shape[0]

    grid = (Bp // BATCH_TILE,)

    out_p = pl.pallas_call(
        mlp_kernel,
        out_shape=jax.ShapeDtypeStruct((Bp, OUT_CH), jnp.float32),
        grid=grid,
        in_specs=[
            # activations stream per batch tile at true width (16 == full dim -> OK)
            pl.BlockSpec((BATCH_TILE, IN_CH), lambda i: (i, 0)),
            # weights/biases: constant block index -> DMA'd once, stay VMEM-resident
            pl.BlockSpec((IN_CH, HID_PAD), lambda i: (0, 0)),                        # w1
            pl.BlockSpec((1, HID_PAD), lambda i: (0, 0)),                            # b1
            pl.BlockSpec((N_HIDDEN_LAYERS, HID_PAD, HID_PAD), lambda i: (0, 0, 0)),  # wh
            pl.BlockSpec((N_HIDDEN_LAYERS, 1, HID_PAD), lambda i: (0, 0, 0)),        # bh
            pl.BlockSpec((HID_PAD, OUT_CH), lambda i: (0, 0)),                       # w3
            pl.BlockSpec((1, OUT_CH), lambda i: (0, 0)),                             # b3
        ],
        # true-width output block: 16x less HBM write, no follow-up column slice
        out_specs=pl.BlockSpec((BATCH_TILE, OUT_CH), lambda i: (i, 0)),
        compiler_params=pltpu.CompilerParams(
            dimension_semantics=("parallel",),  # shard batch tiles across TCs (v7x)
        ),
    )(x, w1p, b1p, whp, bhp, w3p, b3p)

    return out_p if rem == 0 else out_p[:B]


def init_params(key):
    """nn.Linear-style U(-1/sqrt(fan_in), +1/sqrt(fan_in)) init.

    Returns (raw_params, kernel_params):
      raw:    exact logical shapes (for the pure-JAX reference),
      kernel: hidden dim zero-padded to 128 lanes; input (16) and output (8)
              dims kept at true width.
    """
    ks = jax.random.split(key, 2 + N_HIDDEN_LAYERS)

    def lin(k, fan_in, fan_out, in_pad, out_pad):
        kw, kb = jax.random.split(k)
        bound = 1.0 / jnp.sqrt(fan_in)
        w = jax.random.uniform(kw, (fan_in, fan_out), jnp.float32, -bound, bound)
        b = jax.random.uniform(kb, (1, fan_out), jnp.float32, -bound, bound)
        w_p = jnp.zeros((in_pad, out_pad), jnp.float32).at[:fan_in, :fan_out].set(w)
        b_p = jnp.zeros((1, out_pad), jnp.float32).at[:, :fan_out].set(b)
        return (w, b), (w_p, b_p)

    # fc1: (16, 128)  -- only the hidden (output) lanes are padded
    (w1, b1), (w1p, b1p) = lin(ks[0], IN_CH, HIDDEN, IN_CH, HID_PAD)

    wh_l, bh_l, whp_l, bhp_l = [], [], [], []
    for l in range(N_HIDDEN_LAYERS):
        (w, b), (wp, bp) = lin(ks[1 + l], HIDDEN, HIDDEN, HID_PAD, HID_PAD)
        wh_l.append(w); bh_l.append(b); whp_l.append(wp); bhp_l.append(bp)
    wh = jnp.stack(wh_l, 0)            # [N, H, H]
    bh = jnp.stack(bh_l, 0)            # [N, 1, H]
    whp = jnp.stack(whp_l, 0)          # [N, 128, 128]
    bhp = jnp.stack(bhp_l, 0)          # [N, 1, 128]

    # fc3: (128, 8) -- only the hidden (input) lanes are padded; true output width
    (w3, b3), (w3p, b3p) = lin(ks[1 + N_HIDDEN_LAYERS], HIDDEN, OUT_CH, HID_PAD, OUT_CH)

    raw = (w1, b1, wh, bh, w3, b3)
    kparams = (w1p, b1p, whp, bhp, w3p, b3p)
    return raw, kparams


def reference_forward(x, w1, b1, wh, bh, w3, b3):
    h = jnp.maximum(x @ w1 + b1, 0.0)
    for l in range(N_HIDDEN_LAYERS):
        h = jnp.maximum(h @ wh[l] + bh[l], 0.0)
    return h @ w3 + b3


if __name__ == "__main__":
    key = jax.random.PRNGKey(0)
    kx, kp = jax.random.split(key)
    raw, kparams = init_params(kp)

    # Tile-aligned batch: 4 grid steps -> real pipelining and both TCs on v7x,
    # and the row-padding pre-pass is skipped entirely.
    BATCH = 4 * BATCH_TILE
    x = jax.random.normal(kx, (BATCH, IN_CH), jnp.float32)
    out = jax.block_until_ready(network_forward(x, *kparams))
    ref = reference_forward(x, *raw)
    assert out.shape == (BATCH, OUT_CH)
    assert jnp.allclose(out, ref, atol=1e-4, rtol=1e-4), "mismatch vs JAX reference"

    # Non-aligned batch exercises the row-padding path.
    x2 = jax.random.normal(kx, (300, IN_CH), jnp.float32)
    out2 = jax.block_until_ready(network_forward(x2, *kparams))
    ref2 = reference_forward(x2, *raw)
    assert out2.shape == (300, OUT_CH)
    assert jnp.allclose(out2, ref2, atol=1e-4, rtol=1e-4), "mismatch vs JAX reference"

    print("KERNEL_OK")
</pallas_src>

<mosaic_0001>
module attributes {stable_mosaic.version = 11 : i64} {
  func.func @mlp_kernel(%arg0: i32, %arg1: memref<512x16xf32, #tpu.memory_space<vmem>>, %arg2: memref<16x128xf32, #tpu.memory_space<vmem>>, %arg3: memref<1x128xf32, #tpu.memory_space<vmem>>, %arg4: memref<1x128x128xf32, #tpu.memory_space<vmem>>, %arg5: memref<1x1x128xf32, #tpu.memory_space<vmem>>, %arg6: memref<128x8xf32, #tpu.memory_space<vmem>>, %arg7: memref<1x8xf32, #tpu.memory_space<vmem>>, %arg8: memref<512x8xf32, #tpu.memory_space<vmem>>) attributes {dimension_semantics = [#tpu.dimension_semantics<parallel>], iteration_bounds = array<i64: 4>, scalar_prefetch = 0 : i64, scratch_operands = 0 : i64, tpu.core_type = #tpu.core_type<tc>, window_params = [{transform_indices = @transform_0, window_bounds = array<i64: 512, 16>}, {pipeline_mode = #tpu.pipeline_mode<synchronous>, transform_indices = @transform_1, window_bounds = array<i64: 16, 128>}, {pipeline_mode = #tpu.pipeline_mode<synchronous>, transform_indices = @transform_2, window_bounds = array<i64: 1, 128>}, {pipeline_mode = #tpu.pipeline_mode<synchronous>, transform_indices = @transform_3, window_bounds = array<i64: 1, 128, 128>}, {pipeline_mode = #tpu.pipeline_mode<synchronous>, transform_indices = @transform_4, window_bounds = array<i64: 1, 1, 128>}, {pipeline_mode = #tpu.pipeline_mode<synchronous>, transform_indices = @transform_5, window_bounds = array<i64: 128, 8>}, {pipeline_mode = #tpu.pipeline_mode<synchronous>, transform_indices = @transform_6, window_bounds = array<i64: 1, 8>}, {transform_indices = @transform_7, window_bounds = array<i64: 512, 8>}]} {
    %c0 = arith.constant 0 : index
    %c0_0 = arith.constant 0 : index
    %0 = vector.load %arg1[%c0, %c0_0] : memref<512x16xf32, #tpu.memory_space<vmem>>, vector<512x16xf32>
    %c0_1 = arith.constant 0 : index
    %c0_2 = arith.constant 0 : index
    %1 = vector.load %arg2[%c0_1, %c0_2] : memref<16x128xf32, #tpu.memory_space<vmem>>, vector<16x128xf32>
    %cst = arith.constant dense<0.000000e+00> : vector<512x128xf32>
    %2 = tpu.matmul %0, %1, %cst {dimension_numbers = #tpu.dot_dimension_numbers<[1], [0], [0], [1], [0, 0, 1, 1], [], []>} : vector<512x16xf32>, vector<16x128xf32>, vector<512x128xf32> -> vector<512x128xf32>
    %c0_3 = arith.constant 0 : index
    %c0_4 = arith.constant 0 : index
    %3 = vector.load %arg3[%c0_3, %c0_4] : memref<1x128xf32, #tpu.memory_space<vmem>>, vector<1x128xf32>
    %4 = vector.broadcast %3 : vector<1x128xf32> to vector<512x128xf32>
    %5 = arith.addf %2, %4 : vector<512x128xf32>
    %cst_5 = arith.constant 0.000000e+00 : f32
    %6 = vector.broadcast %cst_5 : f32 to vector<512x128xf32>
    %7 = arith.maximumf %5, %6 : vector<512x128xf32>
    %c0_6 = arith.constant 0 : index
    %c0_7 = arith.constant 0 : index
    %c0_8 = arith.constant 0 : index
    %8 = vector.load %arg4[%c0_6, %c0_7, %c0_8] : memref<1x128x128xf32, #tpu.memory_space<vmem>>, vector<1x128x128xf32>
    %9 = vector.shape_cast %8 : vector<1x128x128xf32> to vector<128x128xf32>
    %cst_9 = arith.constant dense<0.000000e+00> : vector<512x128xf32>
    %10 = tpu.matmul %7, %9, %cst_9 {dimension_numbers = #tpu.dot_dimension_numbers<[1], [0], [0], [1], [0, 0, 1, 1], [], []>} : vector<512x128xf32>, vector<128x128xf32>, vector<512x128xf32> -> vector<512x128xf32>
    %c0_10 = arith.constant 0 : index
    %c0_11 = arith.constant 0 : index
    %c0_12 = arith.constant 0 : index
    %11 = vector.load %arg5[%c0_10, %c0_11, %c0_12] : memref<1x1x128xf32, #tpu.memory_space<vmem>>, vector<1x1x128xf32>
    %12 = vector.shape_cast %11 : vector<1x1x128xf32> to vector<1x128xf32>
    %13 = vector.broadcast %12 : vector<1x128xf32> to vector<512x128xf32>
    %14 = arith.addf %10, %13 : vector<512x128xf32>
    %cst_13 = arith.constant 0.000000e+00 : f32
    %15 = vector.broadcast %cst_13 : f32 to vector<512x128xf32>
    %16 = arith.maximumf %14, %15 : vector<512x128xf32>
    %c0_14 = arith.constant 0 : index
    %c0_15 = arith.constant 0 : index
    %17 = vector.load %arg6[%c0_14, %c0_15] : memref<128x8xf32, #tpu.memory_space<vmem>>, vector<128x8xf32>
    %cst_16 = arith.constant dense<0.000000e+00> : vector<512x8xf32>
    %18 = tpu.matmul %16, %17, %cst_16 {dimension_numbers = #tpu.dot_dimension_numbers<[1], [0], [0], [1], [0, 0, 1, 1], [], []>} : vector<512x128xf32>, vector<128x8xf32>, vector<512x8xf32> -> vector<512x8xf32>
    %c0_17 = arith.constant 0 : index
    %c0_18 = arith.constant 0 : index
    %19 = vector.load %arg7[%c0_17, %c0_18] : memref<1x8xf32, #tpu.memory_space<vmem>>, vector<1x8xf32>
    %20 = vector.broadcast %19 : vector<1x8xf32> to vector<512x8xf32>
    %21 = arith.addf %18, %20 : vector<512x8xf32>
    %c0_19 = arith.constant 0 : index
    %c0_20 = arith.constant 0 : index
    %22 = vector.load %arg8[%c0_19, %c0_20] : memref<512x8xf32, #tpu.memory_space<vmem>>, vector<512x8xf32>
    tpu.vector_store %arg8[%c0_19, %c0_20], %21 {strides = array<i32>} : memref<512x8xf32, #tpu.memory_space<vmem>>, vector<512x8xf32>,
    return
  }
  func.func @transform_0(%arg0: i32) -> (i32, i32) {
    %c0_i32 = arith.constant 0 : i32
    %c0_i32_0 = arith.constant 0 : i32
    return %arg0, %c0_i32 : i32, i32
  }
  func.func @transform_1(%arg0: i32) -> (i32, i32) {
    %c0_i32 = arith.constant 0 : i32
    %c0_i32_0 = arith.constant 0 : i32
    %c0_i32_1 = arith.constant 0 : i32
    return %c0_i32, %c0_i32_0 : i32, i32
  }
  func.func @transform_2(%arg0: i32) -> (i32, i32) {
    %c0_i32 = arith.constant 0 : i32
    %c0_i32_0 = arith.constant 0 : i32
    %c0_i32_1 = arith.constant 0 : i32
    return %c0_i32, %c0_i32_0 : i32, i32
  }
  func.func @transform_3(%arg0: i32) -> (i32, i32, i32) {
    %c0_i32 = arith.constant 0 : i32
    %c0_i32_0 = arith.constant 0 : i32
    %c0_i32_1 = arith.constant 0 : i32
    %c0_i32_2 = arith.constant 0 : i32
    return %c0_i32, %c0_i32_0, %c0_i32_1 : i32, i32, i32
  }
  func.func @transform_4(%arg0: i32) -> (i32, i32, i32) {
    %c0_i32 = arith.constant 0 : i32
    %c0_i32_0 = arith.constant 0 : i32
    %c0_i32_1 = arith.constant 0 : i32
    %c0_i32_2 = arith.constant 0 : i32
    return %c0_i32, %c0_i32_0, %c0_i32_1 : i32, i32, i32
  }
  func.func @transform_5(%arg0: i32) -> (i32, i32) {
    %c0_i32 = arith.constant 0 : i32
    %c0_i32_0 = arith.constant 0 : i32
    %c0_i32_1 = arith.constant 0 : i32
    return %c0_i32, %c0_i32_0 : i32, i32
  }
  func.func @transform_6(%arg0: i32) -> (i32, i32) {
    %c0_i32 = arith.constant 0 : i32
    %c0_i32_0 = arith.constant 0 : i32
    %c0_i32_1 = arith.constant 0 : i32
    return %c0_i32, %c0_i32_0 : i32, i32
  }
  func.func @transform_7(%arg0: i32) -> (i32, i32) {
    %c0_i32 = arith.constant 0 : i32
    %c0_i32_0 = arith.constant 0 : i32
    return %arg0, %c0_i32 : i32, i32
  }
}

</mosaic_0001>

<llo_original>
// kernel: network_forward.1
$region0: #{network_forward.1}
  #allocation0 [shape = 'u32[]', space=smem, size = 0x4, offset = 0x4, fixed_abs, tag = 'smem constant byte address 0x4 - core index']
  #allocation1 [shape = 'u32[144,128]{1,0:T(1,128)}', space=vmem, size = 0x12000, scoped, tag = 'internal scratch']
  %s0 = inlined_call_operand.vmem [shape: f32[2048,16], index: 0, kind: input, shape index: {}]
  %s1 = inlined_call_operand.vmem [shape: f32[16,128], index: 1, kind: input, shape index: {}]
  %s2 = inlined_call_operand.vmem [shape: f32[1,128], index: 2, kind: input, shape index: {}]
  %s3 = inlined_call_operand.vmem [shape: f32[1,128,128], index: 3, kind: input, shape index: {}]
  %s4 = inlined_call_operand.vmem [shape: f32[1,1,128], index: 4, kind: input, shape index: {}]
  %s5 = inlined_call_operand.vmem [shape: f32[128,8], index: 5, kind: input, shape index: {}]
  %s6 = inlined_call_operand.vmem [shape: f32[1,8], index: 6, kind: input, shape index: {}]
  %s7 = inlined_call_operand.vmem [shape: f32[2048,8], index: 7, kind: output, shape index: {}]
  %s8 = sld [smem:[#allocation0]]
  $region61: #{network_forward.1} parent=0
    _
  %s10 = ssub.s32 1, %s8
  %s11 = scalar_select 0, %s10, %s8
  loop: start=0, step=1, limit=6
  $region2: #{network_forward.1} parent=0 // loop_pre_header
    _
  $region3: #{network_forward.1} parent=0 // loop_header
    %s13 = sphi 0, %s17
    %p14 = scmp.ge.s32.totalorder %s13, 6
    %s23 = sphi 0, %s25
    %s26 = sphi 0, %s23
    %s27 = sphi 0, %s26
    %s43 = sphi 0, %s27
    %s47 = sphi 0, %s47
    %s49 = sphi 0, %s47
    %s50 = sphi 0, %s49
    %s64 = sphi 0, %s50
    %s68 = sphi 0, %s68
    %s70 = sphi 0, %s68
    %s71 = sphi 0, %s70
    %s85 = sphi 0, %s71
    %s89 = sphi 0, %s89
    %s91 = sphi 0, %s89
    %s92 = sphi 0, %s91
    %s106 = sphi 0, %s92
    %s110 = sphi 0, %s110
    %s112 = sphi 0, %s110
    %s113 = sphi 0, %s112
    %s127 = sphi 0, %s113
    %s131 = sphi 0, %s131
    %s133 = sphi 0, %s131
    %s134 = sphi 0, %s133
    %s148 = sphi 0, %s134
    %s152 = sphi 0, %s152
    %s154 = sphi 0, %s152
    %s155 = sphi 0, %s154
    %s169 = sphi 0, %s155
    %s175 = sphi 0, %s177
    %s178 = sphi 0, %s175
    %s179 = sphi 0, %s178
    %s195 = sphi 0, %s179
  $region4: #{network_forward.1} parent=0 // loop_header_branch
    %16 = sbr.rel (%p14) target = $region8
  $region5: #{network_forward.1} parent=0 // loop_body
    %s18 = ssub.s32 %s13, 1
    %s19 = ssub.s32 %s13, 2
    %s20 = sadd.s32 %s13, 1
    %s21 = ssub.s32 %s13, %s20
    %p22 = scmp.eq.s32.totalorder %s21, 0
    %s24 = sadd.s32 %s23, 1
    %s25 = scalar_select %p22, %s23, %s24
    %p28 = pneg %p22
    %p29 = scmp.eq.s32.totalorder %s13, 3
    %p30 = por %p28, %p29
    %p31 = scmp.ne.s32.totalorder %s23, %s26
    %p32 = scmp.eq.s32.totalorder %s13, 0
    %p33 = por %p31, %p32
    %p34 = scmp.ne.s32.totalorder %s23, %s26
    %p35 = scmp.eq.s32.totalorder %s18, 3
    %p36 = por %p34, %p35
    %p37 = scmp.ne.s32.totalorder %s26, %s27
    %p38 = scmp.eq.s32.totalorder %s18, 0
    %p39 = por %p37, %p38
    %p40 = scmp.ne.s32.totalorder %s26, %s27
    %p41 = scmp.eq.s32.totalorder %s19, 3
    %p42 = por %p40, %p41
    %p44 = scmp.ne.s32.totalorder %s27, %s43
    %p45 = scmp.eq.s32.totalorder %s19, 0
    %p46 = por %p44, %p45
    %s48 = sadd.s32 %s47, 1
    %p51 = scmp.eq.s32.totalorder %s13, 3
    %p52 = scmp.ne.s32.totalorder %s47, %s49
    %p53 = scmp.eq.s32.totalorder %s13, 0
    %p54 = por %p52, %p53
    %p55 = scmp.ne.s32.totalorder %s47, %s49
    %p56 = scmp.eq.s32.totalorder %s18, 3
    %p57 = por %p55, %p56
    %p58 = scmp.ne.s32.totalorder %s49, %s50
    %p59 = scmp.eq.s32.totalorder %s18, 0
    %p60 = por %p58, %p59
    %p61 = scmp.ne.s32.totalorder %s49, %s50
    %p62 = scmp.eq.s32.totalorder %s19, 3
    %p63 = por %p61, %p62
    %p65 = scmp.ne.s32.totalorder %s50, %s64
    %p66 = scmp.eq.s32.totalorder %s19, 0
    %p67 = por %p65, %p66
    %s69 = sadd.s32 %s68, 1
    %p72 = scmp.eq.s32.totalorder %s13, 3
    %p73 = scmp.ne.s32.totalorder %s68, %s70
    %p74 = scmp.eq.s32.totalorder %s13, 0
    %p75 = por %p73, %p74
    %p76 = scmp.ne.s32.totalorder %s68, %s70
    %p77 = scmp.eq.s32.totalorder %s18, 3
    %p78 = por %p76, %p77
    %p79 = scmp.ne.s32.totalorder %s70, %s71
    %p80 = scmp.eq.s32.totalorder %s18, 0
    %p81 = por %p79, %p80
    %p82 = scmp.ne.s32.totalorder %s70, %s71
    %p83 = scmp.eq.s32.totalorder %s19, 3
    %p84 = por %p82, %p83
    %p86 = scmp.ne.s32.totalorder %s71, %s85
    %p87 = scmp.eq.s32.totalorder %s19, 0
    %p88 = por %p86, %p87
    %s90 = sadd.s32 %s89, 1
    %p93 = scmp.eq.s32.totalorder %s13, 3
    %p94 = scmp.ne.s32.totalorder %s89, %s91
    %p95 = scmp.eq.s32.totalorder %s13, 0
    %p96 = por %p94, %p95
    %p97 = scmp.ne.s32.totalorder %s89, %s91
    %p98 = scmp.eq.s32.totalorder %s18, 3
    %p99 = por %p97, %p98
    %p100 = scmp.ne.s32.totalorder %s91, %s92
    %p101 = scmp.eq.s32.totalorder %s18, 0
    %p102 = por %p100, %p101
    %p103 = scmp.ne.s32.totalorder %s91, %s92
    %p104 = scmp.eq.s32.totalorder %s19, 3
    %p105 = por %p103, %p104
    %p107 = scmp.ne.s32.totalorder %s92, %s106
    %p108 = scmp.eq.s32.totalorder %s19, 0
    %p109 = por %p107, %p108
    %s111 = sadd.s32 %s110, 1
    %p114 = scmp.eq.s32.totalorder %s13, 3
    %p115 = scmp.ne.s32.totalorder %s110, %s112
    %p116 = scmp.eq.s32.totalorder %s13, 0
    %p117 = por %p115, %p116
    %p118 = scmp.ne.s32.totalorder %s110, %s112
    %p119 = scmp.eq.s32.totalorder %s18, 3
    %p120 = por %p118, %p119
    %p121 = scmp.ne.s32.totalorder %s112, %s113
    %p122 = scmp.eq.s32.totalorder %s18, 0
    %p123 = por %p121, %p122
    %p124 = scmp.ne.s32.totalorder %s112, %s113
    %p125 = scmp.eq.s32.totalorder %s19, 3
    %p126 = por %p124, %p125
    %p128 = scmp.ne.s32.totalorder %s113, %s127
    %p129 = scmp.eq.s32.totalorder %s19, 0
    %p130 = por %p128, %p129
    %s132 = sadd.s32 %s131, 1
    %p135 = scmp.eq.s32.totalorder %s13, 3
    %p136 = scmp.ne.s32.totalorder %s131, %s133
    %p137 = scmp.eq.s32.totalorder %s13, 0
    %p138 = por %p136, %p137
    %p139 = scmp.ne.s32.totalorder %s131, %s133
    %p140 = scmp.eq.s32.totalorder %s18, 3
    %p141 = por %p139, %p140
    %p142 = scmp.ne.s32.totalorder %s133, %s134
    %p143 = scmp.eq.s32.totalorder %s18, 0
    %p144 = por %p142, %p143
    %p145 = scmp.ne.s32.totalorder %s133, %s134
    %p146 = scmp.eq.s32.totalorder %s19, 3
    %p147 = por %p145, %p146
    %p149 = scmp.ne.s32.totalorder %s134, %s148
    %p150 = scmp.eq.s32.totalorder %s19, 0
    %p151 = por %p149, %p150
    %s153 = sadd.s32 %s152, 1
    %p156 = scmp.eq.s32.totalorder %s13, 3
    %p157 = scmp.ne.s32.totalorder %s152, %s154
    %p158 = scmp.eq.s32.totalorder %s13, 0
    %p159 = por %p157, %p158
    %p160 = scmp.ne.s32.totalorder %s152, %s154
    %p161 = scmp.eq.s32.totalorder %s18, 3
    %p162 = por %p160, %p161
    %p163 = scmp.ne.s32.totalorder %s154, %s155
    %p164 = scmp.eq.s32.totalorder %s18, 0
    %p165 = por %p163, %p164
    %p166 = scmp.ne.s32.totalorder %s154, %s155
    %p167 = scmp.eq.s32.totalorder %s19, 3
    %p168 = por %p166, %p167
    %p170 = scmp.ne.s32.totalorder %s155, %s169
    %p171 = scmp.eq.s32.totalorder %s19, 0
    %p172 = por %p170, %p171
    %s173 = ssub.s32 %s13, %s20
    %p174 = scmp.eq.s32.totalorder %s173, 0
    %s176 = sadd.s32 %s175, 1
    %s177 = scalar_select %p174, %s175, %s176
    %p180 = pneg %p174
    %p181 = scmp.eq.s32.totalorder %s13, 3
    %p182 = por %p180, %p181
    %p183 = scmp.ne.s32.totalorder %s175, %s178
    %p184 = scmp.eq.s32.totalorder %s13, 0
    %p185 = por %p183, %p184
    %p186 = scmp.ne.s32.totalorder %s175, %s178
    %p187 = scmp.eq.s32.totalorder %s18, 3
    %p188 = por %p186, %p187
    %p189 = scmp.ne.s32.totalorder %s178, %s179
    %p190 = scmp.eq.s32.totalorder %s18, 0
    %p191 = por %p189, %p190
    %p192 = scmp.ne.s32.totalorder %s178, %s179
    %p193 = scmp.eq.s32.totalorder %s19, 3
    %p194 = por %p192, %p193
    %p196 = scmp.ne.s32.totalorder %s179, %s195
    %p197 = scmp.eq.s32.totalorder %s19, 0
    %p198 = por %p196, %p197
    %p199 = scmp.le.s32.totalorder 1, %s13
    %p200 = scmp.lt.s32.totalorder %s13, 5
    %p201 = pnand %p199, %p200
    %p202 = pneg %p201
    // Predicated region
    $region9: #{network_forward.1} parent=5 // pred_check
      _
    $region10: #{network_forward.1} parent=5 // pred_check_branch
      %204 = sbr.rel (%p201) target = $region12
    $region11: #{network_forward.1} parent=5 // pred_region
      %s205 = ssub.s32 %s13, 1
      // Predicated region
      $region13: #{network_forward.1} parent=11 // pred_check
        %p206 = pneg %p60
      $region14: #{network_forward.1} parent=11 // pred_check_branch
        %208 = sbr.rel (%p206) target = $region16
      $region15: #{network_forward.1} parent=11 // pred_region
        _
      $region16: #{network_forward.1} parent=11 // pred_fallthru
        _
      // Predicated region
      $region17: #{network_forward.1} parent=11 // pred_check
        %p209 = pneg %p81
      $region18: #{network_forward.1} parent=11 // pred_check_branch
        %211 = sbr.rel (%p209) target = $region20
      $region19: #{network_forward.1} parent=11 // pred_region
        _
      $region20: #{network_forward.1} parent=11 // pred_fallthru
        _
      // Predicated region
      $region21: #{network_forward.1} parent=11 // pred_check
        %p212 = pneg %p102
      $region22: #{network_forward.1} parent=11 // pred_check_branch
        %214 = sbr.rel (%p212) target = $region24
      $region23: #{network_forward.1} parent=11 // pred_region
        _
      $region24: #{network_forward.1} parent=11 // pred_fallthru
        _
      // Predicated region
      $region25: #{network_forward.1} parent=11 // pred_check
        %p215 = pneg %p123
      $region26: #{network_forward.1} parent=11 // pred_check_branch
        %217 = sbr.rel (%p215) target = $region28
      $region27: #{network_forward.1} parent=11 // pred_region
        _
      $region28: #{network_forward.1} parent=11 // pred_fallthru
        _
      // Predicated region
      $region29: #{network_forward.1} parent=11 // pred_check
        %p218 = pneg %p144
      $region30: #{network_forward.1} parent=11 // pred_check_branch
        %220 = sbr.rel (%p218) target = $region32
      $region31: #{network_forward.1} parent=11 // pred_region
        _
      $region32: #{network_forward.1} parent=11 // pred_fallthru
        _
      // Predicated region
      $region33: #{network_forward.1} parent=11 // pred_check
        %p221 = pneg %p165
      $region34: #{network_forward.1} parent=11 // pred_check_branch
        %223 = sbr.rel (%p221) target = $region36
      $region35: #{network_forward.1} parent=11 // pred_region
        _
      $region36: #{network_forward.1} parent=11 // pred_fallthru
        _
    $region12: #{network_forward.1} parent=5 // pred_fallthru
      _
    %p224 = scmp.lt.s32.totalorder %s13, 4
    // Predicated region
    $region37: #{network_forward.1} parent=5 // pred_check
      %p225 = pneg %p224
    $region38: #{network_forward.1} parent=5 // pred_check_branch
      %227 = sbr.rel (%p225) target = $region40
    $region39: #{network_forward.1} parent=5 // pred_region
      // Predicated region
      $region41: #{network_forward.1} parent=39 // pred_check
        %p228 = pneg %p33
      $region42: #{network_forward.1} parent=39 // pred_check_branch
        %230 = sbr.rel (%p228) target = $region44
      $region43: #{network_forward.1} parent=39 // pred_region
        %s231 = smul.u32 64, %s13
        %p232 = scmp.lt.s32.totalorder %s231, 255
        %s233 = scalar_select %p232, %s231, 255
        %s234 = smul.addr %s233, 8
        %s235 = scalar_lea.vmem %s0, %s234
        %s236 = smul.u32 64, %s13
      $region44: #{network_forward.1} parent=39 // pred_fallthru
        _
    $region40: #{network_forward.1} parent=5 // pred_fallthru
      _
    %p237 = scmp.le.s32.totalorder 1, %s13
    %p238 = scmp.lt.s32.totalorder %s13, 5
    %p239 = pnand %p237, %p238
    %p240 = pneg %p239
    // Predicated region
    $region45: #{network_forward.1} parent=5 // pred_check
      _
    $region46: #{network_forward.1} parent=5 // pred_check_branch
      %242 = sbr.rel (%p239) target = $region48
    $region47: #{network_forward.1} parent=5 // pred_region
      %s243 = ssub.s32 %s13, 1
      %s244 = smul.u32 64, %s18
      %p245 = scmp.lt.s32.totalorder %s244, 255
      %s246 = scalar_select %p245, %s244, 255
      %s247 = smul.addr %s246, 8
      %s248 = scalar_lea.vmem %s0, %s247
      %p249 = pneg %p39
      %p250 = pneg %p36
      %p251 = pneg %p60
      %p252 = pneg %p57
      %p253 = pneg %p81
      %p254 = pneg %p78
      %p255 = pneg %p102
      %p256 = pneg %p99
      %p257 = pneg %p123
      %p258 = pneg %p120
      %p259 = pneg %p144
      %p260 = pneg %p141
      %p261 = pneg %p165
      %p262 = pneg %p162
      %p263 = pneg %p191
      %p264 = pneg %p188
      %s265 = smul.u32 64, %s18
      %p266 = scmp.lt.s32.totalorder %s265, 255
      %s267 = scalar_select %p266, %s265, 255
      %s268 = smul.addr %s267, 8
      %s269 = scalar_lea.vmem %s7, %s268
      %s270 = smul.u32 64, %s18
      %p271 = scmp.lt.s32.totalorder %s270, 255
      %s272 = scalar_select %p271, %s270, 255
      %s273 = smul.addr %s272, 8
      %s274 = scalar_lea.vmem %s0, %s273
      %s275 = smul.u32 64, %s18
      %s276 = smul.u32 64, %s18
      %p277 = scmp.lt.s32.totalorder %s276, 255
      %s278 = scalar_select %p277, %s276, 255
      %s279 = smul.addr %s278, 8
      %s280 = scalar_lea.vmem %s7, %s279
      %s281 = smul.u32 64, %s18
      %v282 = vld [vmem:[%s274] sm:$0xff]
      %v283 = vld [vmem:[%s274 + $0x8] sm:$0xff]
      %v284 = vld [vmem:[%s274 + $0x10] sm:$0xff]
      %v285 = vld [vmem:[%s274 + $0x18] sm:$0xff]
      %v286 = vld [vmem:[%s274 + $0x20] sm:$0xff]
      %v287 = vld [vmem:[%s274 + $0x28] sm:$0xff]
      %v288 = vld [vmem:[%s274 + $0x30] sm:$0xff]
      %v289 = vld [vmem:[%s274 + $0x38] sm:$0xff]
      %v290 = vld [vmem:[%s274 + $0x40] sm:$0xff]
      %v291 = vld [vmem:[%s274 + $0x48] sm:$0xff]
      %v292 = vld [vmem:[%s274 + $0x50] sm:$0xff]
      %v293 = vld [vmem:[%s274 + $0x58] sm:$0xff]
      %v294 = vld [vmem:[%s274 + $0x60] sm:$0xff]
      %v295 = vld [vmem:[%s274 + $0x68] sm:$0xff]
      %v296 = vld [vmem:[%s274 + $0x70] sm:$0xff]
      %v297 = vld [vmem:[%s274 + $0x78] sm:$0xff]
      %v298 = vld [vmem:[%s274 + $0x80] sm:$0xff]
      %v299 = vld [vmem:[%s274 + $0x88] sm:$0xff]
      %v300 = vld [vmem:[%s274 + $0x90] sm:$0xff]
      %v301 = vld [vmem:[%s274 + $0x98] sm:$0xff]
      %v302 = vld [vmem:[%s274 + $0xa0] sm:$0xff]
      %v303 = vld [vmem:[%s274 + $0xa8] sm:$0xff]
      %v304 = vld [vmem:[%s274 + $0xb0] sm:$0xff]
      %v305 = vld [vmem:[%s274 + $0xb8] sm:$0xff]
      %v306 = vld [vmem:[%s274 + $0xc0] sm:$0xff]
      %v307 = vld [vmem:[%s274 + $0xc8] sm:$0xff]
      %v308 = vld [vmem:[%s274 + $0xd0] sm:$0xff]
      %v309 = vld [vmem:[%s274 + $0xd8] sm:$0xff]
      %v310 = vld [vmem:[%s274 + $0xe0] sm:$0xff]
      %v311 = vld [vmem:[%s274 + $0xe8] sm:$0xff]
      %v312 = vld [vmem:[%s274 + $0xf0] sm:$0xff]
      %v313 = vld [vmem:[%s274 + $0xf8] sm:$0xff]
      %v314 = vld [vmem:[%s274 + $0x100] sm:$0xff]
      %v315 = vld [vmem:[%s274 + $0x108] sm:$0xff]
      %v316 = vld [vmem:[%s274 + $0x110] sm:$0xff]
      %v317 = vld [vmem:[%s274 + $0x118] sm:$0xff]
      %v318 = vld [vmem:[%s274 + $0x120] sm:$0xff]
      %v319 = vld [vmem:[%s274 + $0x128] sm:$0xff]
      %v320 = vld [vmem:[%s274 + $0x130] sm:$0xff]
      %v321 = vld [vmem:[%s274 + $0x138] sm:$0xff]
      %v322 = vld [vmem:[%s274 + $0x140] sm:$0xff]
      %v323 = vld [vmem:[%s274 + $0x148] sm:$0xff]
      %v324 = vld [vmem:[%s274 + $0x150] sm:$0xff]
      %v325 = vld [vmem:[%s274 + $0x158] sm:$0xff]
      %v326 = vld [vmem:[%s274 + $0x160] sm:$0xff]
      %v327 = vld [vmem:[%s274 + $0x168] sm:$0xff]
      %v328 = vld [vmem:[%s274 + $0x170] sm:$0xff]
      %v329 = vld [vmem:[%s274 + $0x178] sm:$0xff]
      %v330 = vld [vmem:[%s274 + $0x180] sm:$0xff]
      %v331 = vld [vmem:[%s274 + $0x188] sm:$0xff]
      %v332 = vld [vmem:[%s274 + $0x190] sm:$0xff]
      %v333 = vld [vmem:[%s274 + $0x198] sm:$0xff]
      %v334 = vld [vmem:[%s274 + $0x1a0] sm:$0xff]
      %v335 = vld [vmem:[%s274 + $0x1a8] sm:$0xff]
      %v336 = vld [vmem:[%s274 + $0x1b0] sm:$0xff]
      %v337 = vld [vmem:[%s274 + $0x1b8] sm:$0xff]
      %v338 = vld [vmem:[%s274 + $0x1c0] sm:$0xff]
      %v339 = vld [vmem:[%s274 + $0x1c8] sm:$0xff]
      %v340 = vld [vmem:[%s274 + $0x1d0] sm:$0xff]
      %v341 = vld [vmem:[%s274 + $0x1d8] sm:$0xff]
      %v342 = vld [vmem:[%s274 + $0x1e0] sm:$0xff]
      %v343 = vld [vmem:[%s274 + $0x1e8] sm:$0xff]
      %v344 = vld [vmem:[%s274 + $0x1f0] sm:$0xff]
      %v345 = vld [vmem:[%s274 + $0x1f8] sm:$0xff]
      %v346 = vld [vmem:[%s1] sm:$0xff]
      %v347 = vld [vmem:[%s1 + $0x8] sm:$0xff]
      %v348 = vld [vmem:[%s2] sm:$0x1]
      %v350 = vlaneseq
      %v351 = vshrl.u32 %v350, 7
      %v352 = vsub.s32 0, %v351
      %v353 = vrot.slane %v348, %v352
      %vm355 = vcmask 130048
      %v357 = vsel %vm355, %v282, 0
      %v360 = vsel %vm355, %v283, 0
      %v363 = vsel %vm355, %v284, 0
      %v366 = vsel %vm355, %v285, 0
      %v369 = vsel %vm355, %v286, 0
      %v372 = vsel %vm355, %v287, 0
      %v375 = vsel %vm355, %v288, 0
      %v378 = vsel %vm355, %v289, 0
      %v381 = vsel %vm355, %v290, 0
      %v384 = vsel %vm355, %v291, 0
      %v387 = vsel %vm355, %v292, 0
      %v390 = vsel %vm355, %v293, 0
      %v393 = vsel %vm355, %v294, 0
      %v396 = vsel %vm355, %v295, 0
      %v399 = vsel %vm355, %v296, 0
      %v402 = vsel %vm355, %v297, 0
      %v405 = vsel %vm355, %v298, 0
      %v408 = vsel %vm355, %v299, 0
      %v411 = vsel %vm355, %v300, 0
      %v414 = vsel %vm355, %v301, 0
      %v417 = vsel %vm355, %v302, 0
      %v420 = vsel %vm355, %v303, 0
      %v423 = vsel %vm355, %v304, 0
      %v426 = vsel %vm355, %v305, 0
      %v429 = vsel %vm355, %v306, 0
      %v432 = vsel %vm355, %v307, 0
      %v435 = vsel %vm355, %v308, 0
      %v438 = vsel %vm355, %v309, 0
      %v441 = vsel %vm355, %v310, 0
      %v444 = vsel %vm355, %v311, 0
      %v447 = vsel %vm355, %v312, 0
      %v450 = vsel %vm355, %v313, 0
      %v453 = vsel %vm355, %v314, 0
      %v456 = vsel %vm355, %v315, 0
      %v459 = vsel %vm355, %v316, 0
      %v462 = vsel %vm355, %v317, 0
      %v465 = vsel %vm355, %v318, 0
      %v468 = vsel %vm355, %v319, 0
      %v471 = vsel %vm355, %v320, 0
      %v474 = vsel %vm355, %v321, 0
      %v477 = vsel %vm355, %v322, 0
      %v480 = vsel %vm355, %v323, 0
      %v483 = vsel %vm355, %v324, 0
      %v486 = vsel %vm355, %v325, 0
      %v489 = vsel %vm355, %v326, 0
      %v492 = vsel %vm355, %v327, 0
      %v495 = vsel %vm355, %v328, 0
      %v498 = vsel %vm355, %v329, 0
      %v501 = vsel %vm355, %v330, 0
      %v504 = vsel %vm355, %v331, 0
      %v507 = vsel %vm355, %v332, 0
      %v510 = vsel %vm355, %v333, 0
      %v513 = vsel %vm355, %v334, 0
      %v516 = vsel %vm355, %v335, 0
      %v519 = vsel %vm355, %v336, 0
      %v522 = vsel %vm355, %v337, 0
      %v525 = vsel %vm355, %v338, 0
      %v528 = vsel %vm355, %v339, 0
      %v531 = vsel %vm355, %v340, 0
      %v534 = vsel %vm355, %v341, 0
      %v537 = vsel %vm355, %v342, 0
      %v540 = vsel %vm355, %v343, 0
      %v543 = vsel %vm355, %v344, 0
      %v546 = vsel %vm355, %v345, 0
      %548 = vmatprep.subr.mxu0 0.0
      %549 = vmatpush1.msra.mxu0 %v346
      %550 = vmatprep.subr.mxu0 0.0
      %551 = vmatpush1.msra.mxu0 %v347
      %552 = vmatprep.subr.mxu0 0.0
      %553 = vmatpush1.msra.mxu0 0.0
      %554 = vmatprep.subr.mxu0 0.0
      %555 = vmatpush1.msra.mxu0 0.0
      %556 = vmatprep.subr.mxu0 0.0
      %557 = vmatpush1.msra.mxu0 0.0
      %558 = vmatprep.subr.mxu0 0.0
      %559 = vmatpush1.msra.mxu0 0.0
      %560 = vmatprep.subr.mxu0 0.0
      %561 = vmatpush1.msra.mxu0 0.0
      %562 = vmatprep.subr.mxu0 0.0
      %563 = vmatpush1.msra.mxu0 0.0
      %564 = vmatprep.subr.mxu0 0.0
      %565 = vmatpush1.msra.mxu0 0.0
      %566 = vmatprep.subr.mxu0 0.0
      %567 = vmatpush1.msra.mxu0 0.0
      %568 = vmatprep.subr.mxu0 0.0
      %569 = vmatpush1.msra.mxu0 0.0
      %570 = vmatprep.subr.mxu0 0.0
      %571 = vmatpush1.msra.mxu0 0.0
      %572 = vmatprep.subr.mxu0 0.0
      %573 = vmatpush1.msra.mxu0 0.0
      %574 = vmatprep.subr.mxu0 0.0
      %575 = vmatpush1.msra.mxu0 0.0
      %576 = vmatprep.subr.mxu0 0.0
      %577 = vmatpush1.msra.mxu0 0.0
      %578 = vmatprep.subr.mxu0 0.0
      %579 = vmatpush1.msra.mxu0 0.0
      %580 = vmatprep.subr.mxu0 0.0
      %581 = vmatpush1.msra.mxu0 0.0
      %582 = vmatprep.subr.mxu0 0.0
      %583 = vmatpush1.msra.mxu0 0.0
      %584 = vmatprep.subr.mxu0 0.0
      %585 = vmatpush1.msra.mxu0 0.0
      %586 = vmatprep.subr.mxu0 0.0
      %587 = vmatpush1.msra.mxu0 0.0
      %588 = vmatprep.subr.mxu0 0.0
      %589 = vmatpush1.msra.mxu0 0.0
      %590 = vmatprep.subr.mxu0 0.0
      %591 = vmatpush1.msra.mxu0 0.0
      %592 = vmatprep.subr.mxu0 0.0
      %593 = vmatpush1.msra.mxu0 0.0
      %594 = vmatprep.subr.mxu0 0.0
      %595 = vmatpush1.msra.mxu0 0.0
      %596 = vmatprep.subr.mxu0 0.0
      %597 = vmatpush1.msra.mxu0 0.0
      %598 = vmatprep.subr.mxu0 0.0
      %599 = vmatpush1.msra.mxu0 0.0
      %600 = vmatprep.subr.mxu0 0.0
      %601 = vmatpush1.msra.mxu0 0.0
      %602 = vmatprep.subr.mxu0 0.0
      %603 = vmatpush1.msra.mxu0 0.0
      %604 = vmatprep.subr.mxu0 0.0
      %605 = vmatpush1.msra.mxu0 0.0
      %606 = vmatprep.subr.mxu0 0.0
      %607 = vmatpush1.msra.mxu0 0.0
      %608 = vmatprep.subr.mxu0 0.0
      %609 = vmatpush1.msra.mxu0 0.0
      %610 = vmatprep.subr.mxu0 0.0
      %611 = vmatpush1.msra.mxu0 0.0
      %612 = vmatprep.mubr.f32.mxu0 0.0
      %613 = vmatmul.mubr.f32.gmra.mrb[0].mxu0 %v357
      %v614 = vpop.f32.mrb[0].mxu0
      %v615 = vadd.f32 %v353, %v614
      %v616 = vpop.f32.mrb[0].mxu0
      %617 = vmatprep.mubr.f32.mxu0 0.0
      %618 = vmatmul.mubr.f32.gmra.mrb[0].mxu0 %v360
      %v619 = vpop.f32.mrb[0].mxu0
      %v620 = vadd.f32 %v353, %v619
      %v621 = vpop.f32.mrb[0].mxu0
      %622 = vmatprep.mubr.f32.mxu0 0.0
      %623 = vmatmul.mubr.f32.gmra.mrb[0].mxu0 %v363
      %v624 = vpop.f32.mrb[0].mxu0
      %v625 = vadd.f32 %v353, %v624
      %v626 = vpop.f32.mrb[0].mxu0
      %627 = vmatprep.mubr.f32.mxu0 0.0
      %628 = vmatmul.mubr.f32.gmra.mrb[0].mxu0 %v366
      %v629 = vpop.f32.mrb[0].mxu0
      %v630 = vadd.f32 %v353, %v629
      %v631 = vpop.f32.mrb[0].mxu0
      %632 = vmatprep.mubr.f32.mxu0 0.0
      %633 = vmatmul.mubr.f32.gmra.mrb[0].mxu0 %v369
      %v634 = vpop.f32.mrb[0].mxu0
      %v635 = vadd.f32 %v353, %v634
      %v636 = vpop.f32.mrb[0].mxu0
      %637 = vmatprep.mubr.f32.mxu0 0.0
      %638 = vmatmul.mubr.f32.gmra.mrb[0].mxu0 %v372
      %v639 = vpop.f32.mrb[0].mxu0
      %v640 = vadd.f32 %v353, %v639
      %v641 = vpop.f32.mrb[0].mxu0
      %642 = vmatprep.mubr.f32.mxu0 0.0
      %643 = vmatmul.mubr.f32.gmra.mrb[0].mxu0 %v375
      %v644 = vpop.f32.mrb[0].mxu0
      %v645 = vadd.f32 %v353, %v644
      %v646 = vpop.f32.mrb[0].mxu0
      %647 = vmatprep.mubr.f32.mxu0 0.0
      %648 = vmatmul.mubr.f32.gmra.mrb[0].mxu0 %v378
      %v649 = vpop.f32.mrb[0].mxu0
      %v650 = vadd.f32 %v353, %v649
      %v651 = vpop.f32.mrb[0].mxu0
      %652 = vmatprep.mubr.f32.mxu0 0.0
      %653 = vmatmul.mubr.f32.gmra.mrb[0].mxu0 %v381
      %v654 = vpop.f32.mrb[0].mxu0
      %v655 = vadd.f32 %v353, %v654
      %v656 = vpop.f32.mrb[0].mxu0
      %657 = vmatprep.mubr.f32.mxu0 0.0
      %658 = vmatmul.mubr.f32.gmra.mrb[0].mxu0 %v384
      %v659 = vpop.f32.mrb[0].mxu0
      %v660 = vadd.f32 %v353, %v659
      %v661 = vpop.f32.mrb[0].mxu0
      %662 = vmatprep.mubr.f32.mxu0 0.0
      %663 = vmatmul.mubr.f32.gmra.mrb[0].mxu0 %v387
      %v664 = vpop.f32.mrb[0].mxu0
      %v665 = vadd.f32 %v353, %v664
      %v666 = vpop.f32.mrb[0].mxu0
      %667 = vmatprep.mubr.f32.mxu0 0.0
      %668 = vmatmul.mubr.f32.gmra.mrb[0].mxu0 %v390
      %v669 = vpop.f32.mrb[0].mxu0
      %v670 = vadd.f32 %v353, %v669
      %v671 = vpop.f32.mrb[0].mxu0
      %672 = vmatprep.mubr.f32.mxu0 0.0
      %673 = vmatmul.mubr.f32.gmra.mrb[0].mxu0 %v393
      %v674 = vpop.f32.mrb[0].mxu0
      %v675 = vadd.f32 %v353, %v674
      %v676 = vpop.f32.mrb[0].mxu0
      %677 = vmatprep.mubr.f32.mxu0 0.0
      %678 = vmatmul.mubr.f32.gmra.mrb[0].mxu0 %v396
      %v679 = vpop.f32.mrb[0].mxu0
      %v680 = vadd.f32 %v353, %v679
      %v681 = vpop.f32.mrb[0].mxu0
      %682 = vmatprep.mubr.f32.mxu0 0.0
      %683 = vmatmul.mubr.f32.gmra.mrb[0].mxu0 %v399
      %v684 = vpop.f32.mrb[0].mxu0
      %v685 = vadd.f32 %v353, %v684
      %v686 = vpop.f32.mrb[0].mxu0
      %687 = vmatprep.mubr.f32.mxu0 0.0
      %688 = vmatmul.mubr.f32.gmra.mrb[0].mxu0 %v402
      %v689 = vpop.f32.mrb[0].mxu0
      %v690 = vadd.f32 %v353, %v689
      %v691 = vpop.f32.mrb[0].mxu0
      %692 = vmatprep.mubr.f32.mxu0 0.0
      %693 = vmatmul.mubr.f32.gmra.mrb[0].mxu0 %v405
      %v694 = vpop.f32.mrb[0].mxu0
      %v695 = vadd.f32 %v353, %v694
      %v696 = vpop.f32.mrb[0].mxu0
      %697 = vmatprep.mubr.f32.mxu0 0.0
      %698 = vmatmul.mubr.f32.gmra.mrb[0].mxu0 %v408
      %v699 = vpop.f32.mrb[0].mxu0
      %v700 = vadd.f32 %v353, %v699
      %v701 = vpop.f32.mrb[0].mxu0
      %702 = vmatprep.mubr.f32.mxu0 0.0
      %703 = vmatmul.mubr.f32.gmra.mrb[0].mxu0 %v411
      %v704 = vpop.f32.mrb[0].mxu0
      %v705 = vadd.f32 %v353, %v704
      %v706 = vpop.f32.mrb[0].mxu0
      %707 = vmatprep.mubr.f32.mxu0 0.0
      %708 = vmatmul.mubr.f32.gmra.mrb[0].mxu0 %v414
      %v709 = vpop.f32.mrb[0].mxu0
      %v710 = vadd.f32 %v353, %v709
      %v711 = vpop.f32.mrb[0].mxu0
      %712 = vmatprep.mubr.f32.mxu0 0.0
      %713 = vmatmul.mubr.f32.gmra.mrb[0].mxu0 %v417
      %v714 = vpop.f32.mrb[0].mxu0
      %v715 = vadd.f32 %v353, %v714
      %v716 = vpop.f32.mrb[0].mxu0
      %717 = vmatprep.mubr.f32.mxu0 0.0
      %718 = vmatmul.mubr.f32.gmra.mrb[0].mxu0 %v420
      %v719 = vpop.f32.mrb[0].mxu0
      %v720 = vadd.f32 %v353, %v719
      %v721 = vpop.f32.mrb[0].mxu0
      %722 = vmatprep.mubr.f32.mxu0 0.0
      %723 = vmatmul.mubr.f32.gmra.mrb[0].mxu0 %v423
      %v724 = vpop.f32.mrb[0].mxu0
      %v725 = vadd.f32 %v353, %v724
      %v726 = vpop.f32.mrb[0].mxu0
      %727 = vmatprep.mubr.f32.mxu0 0.0
      %728 = vmatmul.mubr.f32.gmra.mrb[0].mxu0 %v426
      %v729 = vpop.f32.mrb[0].mxu0
      %v730 = vadd.f32 %v353, %v729
      %v731 = vpop.f32.mrb[0].mxu0
      %732 = vmatprep.mubr.f32.mxu0 0.0
      %733 = vmatmul.mubr.f32.gmra.mrb[0].mxu0 %v429
      %v734 = vpop.f32.mrb[0].mxu0
      %v735 = vadd.f32 %v353, %v734
      %v736 = vpop.f32.mrb[0].mxu0
      %737 = vmatprep.mubr.f32.mxu0 0.0
      %738 = vmatmul.mubr.f32.gmra.mrb[0].mxu0 %v432
      %v739 = vpop.f32.mrb[0].mxu0
      %v740 = vadd.f32 %v353, %v739
      %v741 = vpop.f32.mrb[0].mxu0
      %742 = vmatprep.mubr.f32.mxu0 0.0
      %743 = vmatmul.mubr.f32.gmra.mrb[0].mxu0 %v435
      %v744 = vpop.f32.mrb[0].mxu0
      %v745 = vadd.f32 %v353, %v744
      %v746 = vpop.f32.mrb[0].mxu0
      %747 = vmatprep.mubr.f32.mxu0 0.0
      %748 = vmatmul.mubr.f32.gmra.mrb[0].mxu0 %v438
      %v749 = vpop.f32.mrb[0].mxu0
      %v750 = vadd.f32 %v353, %v749
      %v751 = vpop.f32.mrb[0].mxu0
      %752 = vmatprep.mubr.f32.mxu0 0.0
      %753 = vmatmul.mubr.f32.gmra.mrb[0].mxu0 %v441
      %v754 = vpop.f32.mrb[0].mxu0
      %v755 = vadd.f32 %v353, %v754
      %v756 = vpop.f32.mrb[0].mxu0
      %757 = vmatprep.mubr.f32.mxu0 0.0
      %758 = vmatmul.mubr.f32.gmra.mrb[0].mxu0 %v444
      %v759 = vpop.f32.mrb[0].mxu0
      %v760 = vadd.f32 %v353, %v759
      %v761 = vpop.f32.mrb[0].mxu0
      %762 = vmatprep.mubr.f32.mxu0 0.0
      %763 = vmatmul.mubr.f32.gmra.mrb[0].mxu0 %v447
      %v764 = vpop.f32.mrb[0].mxu0
      %v765 = vadd.f32 %v353, %v764
      %v766 = vpop.f32.mrb[0].mxu0
      %767 = vmatprep.mubr.f32.mxu0 0.0
      %768 = vmatmul.mubr.f32.gmra.mrb[0].mxu0 %v450
      %v769 = vpop.f32.mrb[0].mxu0
      %v770 = vadd.f32 %v353, %v769
      %v771 = vpop.f32.mrb[0].mxu0
      %772 = vmatprep.mubr.f32.mxu0 0.0
      %773 = vmatmul.mubr.f32.gmra.mrb[0].mxu0 %v453
      %v774 = vpop.f32.mrb[0].mxu0
      %v775 = vadd.f32 %v353, %v774
      %v776 = vpop.f32.mrb[0].mxu0
      %777 = vmatprep.mubr.f32.mxu0 0.0
      %778 = vmatmul.mubr.f32.gmra.mrb[0].mxu0 %v456
      %v779 = vpop.f32.mrb[0].mxu0
      %v780 = vadd.f32 %v353, %v779
      %v781 = vpop.f32.mrb[0].mxu0
      %782 = vmatprep.mubr.f32.mxu0 0.0
      %783 = vmatmul.mubr.f32.gmra.mrb[0].mxu0 %v459
      %v784 = vpop.f32.mrb[0].mxu0
      %v785 = vadd.f32 %v353, %v784
      %v786 = vpop.f32.mrb[0].mxu0
      %787 = vmatprep.mubr.f32.mxu0 0.0
      %788 = vmatmul.mubr.f32.gmra.mrb[0].mxu0 %v462
      %v789 = vpop.f32.mrb[0].mxu0
      %v790 = vadd.f32 %v353, %v789
      %v791 = vpop.f32.mrb[0].mxu0
      %792 = vmatprep.mubr.f32.mxu0 0.0
      %793 = vmatmul.mubr.f32.gmra.mrb[0].mxu0 %v465
      %v794 = vpop.f32.mrb[0].mxu0
      %v795 = vadd.f32 %v353, %v794
      %v796 = vpop.f32.mrb[0].mxu0
      %797 = vmatprep.mubr.f32.mxu0 0.0
      %798 = vmatmul.mubr.f32.gmra.mrb[0].mxu0 %v468
      %v799 = vpop.f32.mrb[0].mxu0
      %v800 = vadd.f32 %v353, %v799
      %v801 = vpop.f32.mrb[0].mxu0
      %802 = vmatprep.mubr.f32.mxu0 0.0
      %803 = vmatmul.mubr.f32.gmra.mrb[0].mxu0 %v471
      %v804 = vpop.f32.mrb[0].mxu0
      %v805 = vadd.f32 %v353, %v804
      %v806 = vpop.f32.mrb[0].mxu0
      %807 = vmatprep.mubr.f32.mxu0 0.0
      %808 = vmatmul.mubr.f32.gmra.mrb[0].mxu0 %v474
      %v809 = vpop.f32.mrb[0].mxu0
      %v810 = vadd.f32 %v353, %v809
      %v811 = vpop.f32.mrb[0].mxu0
      %812 = vmatprep.mubr.f32.mxu0 0.0
      %813 = vmatmul.mubr.f32.gmra.mrb[0].mxu0 %v477
      %v814 = vpop.f32.mrb[0].mxu0
      %v815 = vadd.f32 %v353, %v814
      %v816 = vpop.f32.mrb[0].mxu0
      %817 = vmatprep.mubr.f32.mxu0 0.0
      %818 = vmatmul.mubr.f32.gmra.mrb[0].mxu0 %v480
      %v819 = vpop.f32.mrb[0].mxu0
      %v820 = vadd.f32 %v353, %v819
      %v821 = vpop.f32.mrb[0].mxu0
      %822 = vmatprep.mubr.f32.mxu0 0.0
      %823 = vmatmul.mubr.f32.gmra.mrb[0].mxu0 %v483
      %v824 = vpop.f32.mrb[0].mxu0
      %v825 = vadd.f32 %v353, %v824
      %v826 = vpop.f32.mrb[0].mxu0
      %827 = vmatprep.mubr.f32.mxu0 0.0
      %828 = vmatmul.mubr.f32.gmra.mrb[0].mxu0 %v486
      %v829 = vpop.f32.mrb[0].mxu0
      %v830 = vadd.f32 %v353, %v829
      %v831 = vpop.f32.mrb[0].mxu0
      %832 = vmatprep.mubr.f32.mxu0 0.0
      %833 = vmatmul.mubr.f32.gmra.mrb[0].mxu0 %v489
      %v834 = vpop.f32.mrb[0].mxu0
      %v835 = vadd.f32 %v353, %v834
      %v836 = vpop.f32.mrb[0].mxu0
      %837 = vmatprep.mubr.f32.mxu0 0.0
      %838 = vmatmul.mubr.f32.gmra.mrb[0].mxu0 %v492
      %v839 = vpop.f32.mrb[0].mxu0
      %v840 = vadd.f32 %v353, %v839
      %v841 = vpop.f32.mrb[0].mxu0
      %842 = vmatprep.mubr.f32.mxu0 0.0
      %843 = vmatmul.mubr.f32.gmra.mrb[0].mxu0 %v495
      %v844 = vpop.f32.mrb[0].mxu0
      %v845 = vadd.f32 %v353, %v844
      %v846 = vpop.f32.mrb[0].mxu0
      %847 = vmatprep.mubr.f32.mxu0 0.0
      %848 = vmatmul.mubr.f32.gmra.mrb[0].mxu0 %v498
      %v849 = vpop.f32.mrb[0].mxu0
      %v850 = vadd.f32 %v353, %v849
      %v851 = vpop.f32.mrb[0].mxu0
      %852 = vmatprep.mubr.f32.mxu0 0.0
      %853 = vmatmul.mubr.f32.gmra.mrb[0].mxu0 %v501
      %v854 = vpop.f32.mrb[0].mxu0
      %v855 = vadd.f32 %v353, %v854
      %v856 = vpop.f32.mrb[0].mxu0
      %857 = vmatprep.mubr.f32.mxu0 0.0
      %858 = vmatmul.mubr.f32.gmra.mrb[0].mxu0 %v504
      %v859 = vpop.f32.mrb[0].mxu0
      %v860 = vadd.f32 %v353, %v859
      %v861 = vpop.f32.mrb[0].mxu0
      %862 = vmatprep.mubr.f32.mxu0 0.0
      %863 = vmatmul.mubr.f32.gmra.mrb[0].mxu0 %v507
      %v864 = vpop.f32.mrb[0].mxu0
      %v865 = vadd.f32 %v353, %v864
      %v866 = vpop.f32.mrb[0].mxu0
      %867 = vmatprep.mubr.f32.mxu0 0.0
      %868 = vmatmul.mubr.f32.gmra.mrb[0].mxu0 %v510
      %v869 = vpop.f32.mrb[0].mxu0
      %v870 = vadd.f32 %v353, %v869
      %v871 = vpop.f32.mrb[0].mxu0
      %872 = vmatprep.mubr.f32.mxu0 0.0
      %873 = vmatmul.mubr.f32.gmra.mrb[0].mxu0 %v513
      %v874 = vpop.f32.mrb[0].mxu0
      %v875 = vadd.f32 %v353, %v874
      %v876 = vpop.f32.mrb[0].mxu0
      %877 = vmatprep.mubr.f32.mxu0 0.0
      %878 = vmatmul.mubr.f32.gmra.mrb[0].mxu0 %v516
      %v879 = vpop.f32.mrb[0].mxu0
      %v880 = vadd.f32 %v353, %v879
      %v881 = vpop.f32.mrb[0].mxu0
      %882 = vmatprep.mubr.f32.mxu0 0.0
      %883 = vmatmul.mubr.f32.gmra.mrb[0].mxu0 %v519
      %v884 = vpop.f32.mrb[0].mxu0
      %v885 = vadd.f32 %v353, %v884
      %v886 = vpop.f32.mrb[0].mxu0
      %887 = vmatprep.mubr.f32.mxu0 0.0
      %888 = vmatmul.mubr.f32.gmra.mrb[0].mxu0 %v522
      %v889 = vpop.f32.mrb[0].mxu0
      %v890 = vadd.f32 %v353, %v889
      %v891 = vpop.f32.mrb[0].mxu0
      %892 = vmatprep.mubr.f32.mxu0 0.0
      %893 = vmatmul.mubr.f32.gmra.mrb[0].mxu0 %v525
      %v894 = vpop.f32.mrb[0].mxu0
      %v895 = vadd.f32 %v353, %v894
      %v896 = vpop.f32.mrb[0].mxu0
      %897 = vmatprep.mubr.f32.mxu0 0.0
      %898 = vmatmul.mubr.f32.gmra.mrb[0].mxu0 %v528
      %v899 = vpop.f32.mrb[0].mxu0
      %v900 = vadd.f32 %v353, %v899
      %v901 = vpop.f32.mrb[0].mxu0
      %902 = vmatprep.mubr.f32.mxu0 0.0
      %903 = vmatmul.mubr.f32.gmra.mrb[0].mxu0 %v531
      %v904 = vpop.f32.mrb[0].mxu0
      %v905 = vadd.f32 %v353, %v904
      %v906 = vpop.f32.mrb[0].mxu0
      %907 = vmatprep.mubr.f32.mxu0 0.0
      %908 = vmatmul.mubr.f32.gmra.mrb[0].mxu0 %v534
      %v909 = vpop.f32.mrb[0].mxu0
      %v910 = vadd.f32 %v353, %v909
      %v911 = vpop.f32.mrb[0].mxu0
      %912 = vmatprep.mubr.f32.mxu0 0.0
      %913 = vmatmul.mubr.f32.gmra.mrb[0].mxu0 %v537
      %v914 = vpop.f32.mrb[0].mxu0
      %v915 = vadd.f32 %v353, %v914
      %v916 = vpop.f32.mrb[0].mxu0
      %917 = vmatprep.mubr.f32.mxu0 0.0
      %918 = vmatmul.mubr.f32.gmra.mrb[0].mxu0 %v540
      %v919 = vpop.f32.mrb[0].mxu0
      %v920 = vadd.f32 %v353, %v919
      %v921 = vpop.f32.mrb[0].mxu0
      %922 = vmatprep.mubr.f32.mxu0 0.0
      %923 = vmatmul.mubr.f32.gmra.mrb[0].mxu0 %v543
      %v924 = vpop.f32.mrb[0].mxu0
      %v925 = vadd.f32 %v353, %v924
      %v926 = vpop.f32.mrb[0].mxu0
      %927 = vmatprep.mubr.f32.mxu0 0.0
      %928 = vmatmul.mubr.f32.gmra.mrb[0].mxu0 %v546
      %v929 = vpop.f32.mrb[0].mxu0
      %v930 = vadd.f32 %v353, %v929
      %v931 = vpop.f32.mrb[0].mxu0
      %932 = vdwg.mxu0
      %v933 = vmax.f32 %v615, 0.0
      %v934 = vmax.f32 %v620, 0.0
      %v935 = vmax.f32 %v625, 0.0
      %v936 = vmax.f32 %v630, 0.0
      %v937 = vmax.f32 %v635, 0.0
      %v938 = vmax.f32 %v640, 0.0
      %v939 = vmax.f32 %v645, 0.0
      %v940 = vmax.f32 %v650, 0.0
      %v941 = vmax.f32 %v655, 0.0
      %v942 = vmax.f32 %v660, 0.0
      %v943 = vmax.f32 %v665, 0.0
      %v944 = vmax.f32 %v670, 0.0
      %v945 = vmax.f32 %v675, 0.0
      %v946 = vmax.f32 %v680, 0.0
      %v947 = vmax.f32 %v685, 0.0
      %v948 = vmax.f32 %v690, 0.0
      %v949 = vmax.f32 %v695, 0.0
      %v950 = vmax.f32 %v700, 0.0
      %v951 = vmax.f32 %v705, 0.0
      %v952 = vmax.f32 %v710, 0.0
      %v953 = vmax.f32 %v715, 0.0
      %v954 = vmax.f32 %v720, 0.0
      %v955 = vmax.f32 %v725, 0.0
      %v956 = vmax.f32 %v730, 0.0
      %v957 = vmax.f32 %v735, 0.0
      %v958 = vmax.f32 %v740, 0.0
      %v959 = vmax.f32 %v745, 0.0
      %v960 = vmax.f32 %v750, 0.0
      %v961 = vmax.f32 %v755, 0.0
      %v962 = vmax.f32 %v760, 0.0
      %v963 = vmax.f32 %v765, 0.0
      %v964 = vmax.f32 %v770, 0.0
      %v965 = vmax.f32 %v775, 0.0
      %v966 = vmax.f32 %v780, 0.0
      %v967 = vmax.f32 %v785, 0.0
      %v968 = vmax.f32 %v790, 0.0
      %v969 = vmax.f32 %v795, 0.0
      %v970 = vmax.f32 %v800, 0.0
      %v971 = vmax.f32 %v805, 0.0
      %v972 = vmax.f32 %v810, 0.0
      %v973 = vmax.f32 %v815, 0.0
      %v974 = vmax.f32 %v820, 0.0
      %v975 = vmax.f32 %v825, 0.0
      %v976 = vmax.f32 %v830, 0.0
      %v977 = vmax.f32 %v835, 0.0
      %v978 = vmax.f32 %v840, 0.0
      %v979 = vmax.f32 %v845, 0.0
      %v980 = vmax.f32 %v850, 0.0
      %v981 = vmax.f32 %v855, 0.0
      %v982 = vmax.f32 %v860, 0.0
      %v983 = vmax.f32 %v865, 0.0
      %v984 = vmax.f32 %v870, 0.0
      %v985 = vmax.f32 %v875, 0.0
      %v986 = vmax.f32 %v880, 0.0
      %v987 = vmax.f32 %v885, 0.0
      %v988 = vmax.f32 %v890, 0.0
      %v989 = vmax.f32 %v895, 0.0
      %v990 = vmax.f32 %v900, 0.0
      %v991 = vmax.f32 %v905, 0.0
      %v992 = vmax.f32 %v910, 0.0
      %v993 = vmax.f32 %v915, 0.0
      %v994 = vmax.f32 %v920, 0.0
      %v995 = vmax.f32 %v925, 0.0
      %v996 = vmax.f32 %v930, 0.0
      %v997 = vld [vmem:[%s3] sm:$0xff]
      %v998 = vld [vmem:[%s3 + $0x8] sm:$0xff]
      %v999 = vld [vmem:[%s3 + $0x10] sm:$0xff]
      %v1000 = vld [vmem:[%s3 + $0x18] sm:$0xff]
      %v1001 = vld [vmem:[%s3 + $0x20] sm:$0xff]
      %v1002 = vld [vmem:[%s3 + $0x28] sm:$0xff]
      %v1003 = vld [vmem:[%s3 + $0x30] sm:$0xff]
      %v1004 = vld [vmem:[%s3 + $0x38] sm:$0xff]
      %v1005 = vld [vmem:[%s3 + $0x40] sm:$0xff]
      %v1006 = vld [vmem:[%s3 + $0x48] sm:$0xff]
      %v1007 = vld [vmem:[%s3 + $0x50] sm:$0xff]
      %v1008 = vld [vmem:[%s3 + $0x58] sm:$0xff]
      %v1009 = vld [vmem:[%s3 + $0x60] sm:$0xff]
      %v1010 = vld [vmem:[%s3 + $0x68] sm:$0xff]
      %v1011 = vld [vmem:[%s3 + $0x70] sm:$0xff]
      %v1012 = vld [vmem:[%s3 + $0x78] sm:$0xff]
      %v1013 = vld [vmem:[%s4] sm:$0x1]
      %v1015 = vlaneseq
      %v1016 = vshrl.u32 %v1015, 7
      %v1017 = vsub.s32 0, %v1016
      %v1018 = vrot.slane %v1013, %v1017
      %1020 = vmatprep.subr.mxu0 0.0
      %1021 = vmatpush1.msra.mxu0 %v997
      %1022 = vmatprep.subr.mxu0 0.0
      %1023 = vmatpush1.msra.mxu0 %v998
      %1024 = vmatprep.subr.mxu0 0.0
      %1025 = vmatpush1.msra.mxu0 %v999
      %1026 = vmatprep.subr.mxu0 0.0
      %1027 = vmatpush1.msra.mxu0 %v1000
      %1028 = vmatprep.subr.mxu0 0.0
      %1029 = vmatpush1.msra.mxu0 %v1001
      %1030 = vmatprep.subr.mxu0 0.0
      %1031 = vmatpush1.msra.mxu0 %v1002
      %1032 = vmatprep.subr.mxu0 0.0
      %1033 = vmatpush1.msra.mxu0 %v1003
      %1034 = vmatprep.subr.mxu0 0.0
      %1035 = vmatpush1.msra.mxu0 %v1004
      %1036 = vmatprep.subr.mxu0 0.0
      %1037 = vmatpush1.msra.mxu0 %v1005
      %1038 = vmatprep.subr.mxu0 0.0
      %1039 = vmatpush1.msra.mxu0 %v1006
      %1040 = vmatprep.subr.mxu0 0.0
      %1041 = vmatpush1.msra.mxu0 %v1007
      %1042 = vmatprep.subr.mxu0 0.0
      %1043 = vmatpush1.msra.mxu0 %v1008
      %1044 = vmatprep.subr.mxu0 0.0
      %1045 = vmatpush1.msra.mxu0 %v1009
      %1046 = vmatprep.subr.mxu0 0.0
      %1047 = vmatpush1.msra.mxu0 %v1010
      %1048 = vmatprep.subr.mxu0 0.0
      %1049 = vmatpush1.msra.mxu0 %v1011
      %1050 = vmatprep.subr.mxu0 0.0
      %1051 = vmatpush1.msra.mxu0 %v1012
      %1052 = vmatprep.subr.mxu0 0.0
      %1053 = vmatpush1.msra.mxu0 0.0
      %1054 = vmatprep.subr.mxu0 0.0
      %1055 = vmatpush1.msra.mxu0 0.0
      %1056 = vmatprep.subr.mxu0 0.0
      %1057 = vmatpush1.msra.mxu0 0.0
      %1058 = vmatprep.subr.mxu0 0.0
      %1059 = vmatpush1.msra.mxu0 0.0
      %1060 = vmatprep.subr.mxu0 0.0
      %1061 = vmatpush1.msra.mxu0 0.0
      %1062 = vmatprep.subr.mxu0 0.0
      %1063 = vmatpush1.msra.mxu0 0.0
      %1064 = vmatprep.subr.mxu0 0.0
      %1065 = vmatpush1.msra.mxu0 0.0
      %1066 = vmatprep.subr.mxu0 0.0
      %1067 = vmatpush1.msra.mxu0 0.0
      %1068 = vmatprep.subr.mxu0 0.0
      %1069 = vmatpush1.msra.mxu0 0.0
      %1070 = vmatprep.subr.mxu0 0.0
      %1071 = vmatpush1.msra.mxu0 0.0
      %1072 = vmatprep.subr.mxu0 0.0
      %1073 = vmatpush1.msra.mxu0 0.0
      %1074 = vmatprep.subr.mxu0 0.0
      %1075 = vmatpush1.msra.mxu0 0.0
      %1076 = vmatprep.subr.mxu0 0.0
      %1077 = vmatpush1.msra.mxu0 0.0
      %1078 = vmatprep.subr.mxu0 0.0
      %1079 = vmatpush1.msra.mxu0 0.0
      %1080 = vmatprep.subr.mxu0 0.0
      %1081 = vmatpush1.msra.mxu0 0.0
      %1082 = vmatprep.subr.mxu0 0.0
      %1083 = vmatpush1.msra.mxu0 0.0
      %1084 = vmatprep.mubr.f32.mxu0 0.0
      %1085 = vmatmul.mubr.f32.gmra.mrb[0].mxu0 %v933
      %v1086 = vpop.f32.mrb[0].mxu0
      %v1087 = vadd.f32 %v1018, %v1086
      %v1088 = vpop.f32.mrb[0].mxu0
      %1089 = vmatprep.mubr.f32.mxu0 0.0
      %1090 = vmatmul.mubr.f32.gmra.mrb[0].mxu0 %v934
      %v1091 = vpop.f32.mrb[0].mxu0
      %v1092 = vadd.f32 %v1018, %v1091
      %v1093 = vpop.f32.mrb[0].mxu0
      %1094 = vmatprep.mubr.f32.mxu0 0.0
      %1095 = vmatmul.mubr.f32.gmra.mrb[0].mxu0 %v935
      %v1096 = vpop.f32.mrb[0].mxu0
      %v1097 = vadd.f32 %v1018, %v1096
      %v1098 = vpop.f32.mrb[0].mxu0
      %1099 = vmatprep.mubr.f32.mxu0 0.0
      %1100 = vmatmul.mubr.f32.gmra.mrb[0].mxu0 %v936
      %v1101 = vpop.f32.mrb[0].mxu0
      %v1102 = vadd.f32 %v1018, %v1101
      %v1103 = vpop.f32.mrb[0].mxu0
      %1104 = vmatprep.mubr.f32.mxu0 0.0
      %1105 = vmatmul.mubr.f32.gmra.mrb[0].mxu0 %v937
      %v1106 = vpop.f32.mrb[0].mxu0
      %v1107 = vadd.f32 %v1018, %v1106
      %v1108 = vpop.f32.mrb[0].mxu0
      %1109 = vmatprep.mubr.f32.mxu0 0.0
      %1110 = vmatmul.mubr.f32.gmra.mrb[0].mxu0 %v938
      %v1111 = vpop.f32.mrb[0].mxu0
      %v1112 = vadd.f32 %v1018, %v1111
      %v1113 = vpop.f32.mrb[0].mxu0
      %1114 = vmatprep.mubr.f32.mxu0 0.0
      %1115 = vmatmul.mubr.f32.gmra.mrb[0].mxu0 %v939
      %v1116 = vpop.f32.mrb[0].mxu0
      %v1117 = vadd.f32 %v1018, %v1116
      %v1118 = vpop.f32.mrb[0].mxu0
      %1119 = vmatprep.mubr.f32.mxu0 0.0
      %1120 = vmatmul.mubr.f32.gmra.mrb[0].mxu0 %v940
      %v1121 = vpop.f32.mrb[0].mxu0
      %v1122 = vadd.f32 %v1018, %v1121
      %v1123 = vpop.f32.mrb[0].mxu0
      %1124 = vmatprep.mubr.f32.mxu0 0.0
      %1125 = vmatmul.mubr.f32.gmra.mrb[0].mxu0 %v941
      %v1126 = vpop.f32.mrb[0].mxu0
      %v1127 = vadd.f32 %v1018, %v1126
      %v1128 = vpop.f32.mrb[0].mxu0
      %1129 = vmatprep.mubr.f32.mxu0 0.0
      %1130 = vmatmul.mubr.f32.gmra.mrb[0].mxu0 %v942
      %v1131 = vpop.f32.mrb[0].mxu0
      %v1132 = vadd.f32 %v1018, %v1131
      %v1133 = vpop.f32.mrb[0].mxu0
      %1134 = vmatprep.mubr.f32.mxu0 0.0
      %1135 = vmatmul.mubr.f32.gmra.mrb[0].mxu0 %v943
      %v1136 = vpop.f32.mrb[0].mxu0
      %v1137 = vadd.f32 %v1018, %v1136
      %v1138 = vpop.f32.mrb[0].mxu0
      %1139 = vmatprep.mubr.f32.mxu0 0.0
      %1140 = vmatmul.mubr.f32.gmra.mrb[0].mxu0 %v944
      %v1141 = vpop.f32.mrb[0].mxu0
      %v1142 = vadd.f32 %v1018, %v1141
      %v1143 = vpop.f32.mrb[0].mxu0
      %1144 = vmatprep.mubr.f32.mxu0 0.0
      %1145 = vmatmul.mubr.f32.gmra.mrb[0].mxu0 %v945
      %v1146 = vpop.f32.mrb[0].mxu0
      %v1147 = vadd.f32 %v1018, %v1146
      %v1148 = vpop.f32.mrb[0].mxu0
      %1149 = vmatprep.mubr.f32.mxu0 0.0
      %1150 = vmatmul.mubr.f32.gmra.mrb[0].mxu0 %v946
      %v1151 = vpop.f32.mrb[0].mxu0
      %v1152 = vadd.f32 %v1018, %v1151
      %v1153 = vpop.f32.mrb[0].mxu0
      %1154 = vmatprep.mubr.f32.mxu0 0.0
      %1155 = vmatmul.mubr.f32.gmra.mrb[0].mxu0 %v947
      %v1156 = vpop.f32.mrb[0].mxu0
      %v1157 = vadd.f32 %v1018, %v1156
      %v1158 = vpop.f32.mrb[0].mxu0
      %1159 = vmatprep.mubr.f32.mxu0 0.0
      %1160 = vmatmul.mubr.f32.gmra.mrb[0].mxu0 %v948
      %v1161 = vpop.f32.mrb[0].mxu0
      %v1162 = vadd.f32 %v1018, %v1161
      %v1163 = vpop.f32.mrb[0].mxu0
      %1164 = vmatprep.mubr.f32.mxu0 0.0
      %1165 = vmatmul.mubr.f32.gmra.mrb[0].mxu0 %v949
      %v1166 = vpop.f32.mrb[0].mxu0
      %v1167 = vadd.f32 %v1018, %v1166
      %v1168 = vpop.f32.mrb[0].mxu0
      %1169 = vmatprep.mubr.f32.mxu0 0.0
      %1170 = vmatmul.mubr.f32.gmra.mrb[0].mxu0 %v950
      %v1171 = vpop.f32.mrb[0].mxu0
      %v1172 = vadd.f32 %v1018, %v1171
      %v1173 = vpop.f32.mrb[0].mxu0
      %1174 = vmatprep.mubr.f32.mxu0 0.0
      %1175 = vmatmul.mubr.f32.gmra.mrb[0].mxu0 %v951
      %v1176 = vpop.f32.mrb[0].mxu0
      %v1177 = vadd.f32 %v1018, %v1176
      %v1178 = vpop.f32.mrb[0].mxu0
      %1179 = vmatprep.mubr.f32.mxu0 0.0
      %1180 = vmatmul.mubr.f32.gmra.mrb[0].mxu0 %v952
      %v1181 = vpop.f32.mrb[0].mxu0
      %v1182 = vadd.f32 %v1018, %v1181
      %v1183 = vpop.f32.mrb[0].mxu0
      %1184 = vmatprep.mubr.f32.mxu0 0.0
      %1185 = vmatmul.mubr.f32.gmra.mrb[0].mxu0 %v953
      %v1186 = vpop.f32.mrb[0].mxu0
      %v1187 = vadd.f32 %v1018, %v1186
      %v1188 = vpop.f32.mrb[0].mxu0
      %1189 = vmatprep.mubr.f32.mxu0 0.0
      %1190 = vmatmul.mubr.f32.gmra.mrb[0].mxu0 %v954
      %v1191 = vpop.f32.mrb[0].mxu0
      %v1192 = vadd.f32 %v1018, %v1191
      %v1193 = vpop.f32.mrb[0].mxu0
      %1194 = vmatprep.mubr.f32.mxu0 0.0
      %1195 = vmatmul.mubr.f32.gmra.mrb[0].mxu0 %v955
      %v1196 = vpop.f32.mrb[0].mxu0
      %v1197 = vadd.f32 %v1018, %v1196
      %v1198 = vpop.f32.mrb[0].mxu0
      %1199 = vmatprep.mubr.f32.mxu0 0.0
      %1200 = vmatmul.mubr.f32.gmra.mrb[0].mxu0 %v956
      %v1201 = vpop.f32.mrb[0].mxu0
      %v1202 = vadd.f32 %v1018, %v1201
      %v1203 = vpop.f32.mrb[0].mxu0
      %1204 = vmatprep.mubr.f32.mxu0 0.0
      %1205 = vmatmul.mubr.f32.gmra.mrb[0].mxu0 %v957
      %v1206 = vpop.f32.mrb[0].mxu0
      %v1207 = vadd.f32 %v1018, %v1206
      %v1208 = vpop.f32.mrb[0].mxu0
      %1209 = vmatprep.mubr.f32.mxu0 0.0
      %1210 = vmatmul.mubr.f32.gmra.mrb[0].mxu0 %v958
      %v1211 = vpop.f32.mrb[0].mxu0
      %v1212 = vadd.f32 %v1018, %v1211
      %v1213 = vpop.f32.mrb[0].mxu0
      %1214 = vmatprep.mubr.f32.mxu0 0.0
      %1215 = vmatmul.mubr.f32.gmra.mrb[0].mxu0 %v959
      %v1216 = vpop.f32.mrb[0].mxu0
      %v1217 = vadd.f32 %v1018, %v1216
      %v1218 = vpop.f32.mrb[0].mxu0
      %1219 = vmatprep.mubr.f32.mxu0 0.0
      %1220 = vmatmul.mubr.f32.gmra.mrb[0].mxu0 %v960
      %v1221 = vpop.f32.mrb[0].mxu0
      %v1222 = vadd.f32 %v1018, %v1221
      %v1223 = vpop.f32.mrb[0].mxu0
      %1224 = vmatprep.mubr.f32.mxu0 0.0
      %1225 = vmatmul.mubr.f32.gmra.mrb[0].mxu0 %v961
      %v1226 = vpop.f32.mrb[0].mxu0
      %v1227 = vadd.f32 %v1018, %v1226
      %v1228 = vpop.f32.mrb[0].mxu0
      %1229 = vmatprep.mubr.f32.mxu0 0.0
      %1230 = vmatmul.mubr.f32.gmra.mrb[0].mxu0 %v962
      %v1231 = vpop.f32.mrb[0].mxu0
      %v1232 = vadd.f32 %v1018, %v1231
      %v1233 = vpop.f32.mrb[0].mxu0
      %1234 = vmatprep.mubr.f32.mxu0 0.0
      %1235 = vmatmul.mubr.f32.gmra.mrb[0].mxu0 %v963
      %v1236 = vpop.f32.mrb[0].mxu0
      %v1237 = vadd.f32 %v1018, %v1236
      %v1238 = vpop.f32.mrb[0].mxu0
      %1239 = vmatprep.mubr.f32.mxu0 0.0
      %1240 = vmatmul.mubr.f32.gmra.mrb[0].mxu0 %v964
      %v1241 = vpop.f32.mrb[0].mxu0
      %v1242 = vadd.f32 %v1018, %v1241
      %v1243 = vpop.f32.mrb[0].mxu0
      %1244 = vmatprep.mubr.f32.mxu0 0.0
      %1245 = vmatmul.mubr.f32.gmra.mrb[0].mxu0 %v965
      %v1246 = vpop.f32.mrb[0].mxu0
      %v1247 = vadd.f32 %v1018, %v1246
      %v1248 = vpop.f32.mrb[0].mxu0
      %1249 = vmatprep.mubr.f32.mxu0 0.0
      %1250 = vmatmul.mubr.f32.gmra.mrb[0].mxu0 %v966
      %v1251 = vpop.f32.mrb[0].mxu0
      %v1252 = vadd.f32 %v1018, %v1251
      %v1253 = vpop.f32.mrb[0].mxu0
      %1254 = vmatprep.mubr.f32.mxu0 0.0
      %1255 = vmatmul.mubr.f32.gmra.mrb[0].mxu0 %v967
      %v1256 = vpop.f32.mrb[0].mxu0
      %v1257 = vadd.f32 %v1018, %v1256
      %v1258 = vpop.f32.mrb[0].mxu0
      %1259 = vmatprep.mubr.f32.mxu0 0.0
      %1260 = vmatmul.mubr.f32.gmra.mrb[0].mxu0 %v968
      %v1261 = vpop.f32.mrb[0].mxu0
      %v1262 = vadd.f32 %v1018, %v1261
      %v1263 = vpop.f32.mrb[0].mxu0
      %1264 = vmatprep.mubr.f32.mxu0 0.0
      %1265 = vmatmul.mubr.f32.gmra.mrb[0].mxu0 %v969
      %v1266 = vpop.f32.mrb[0].mxu0
      %v1267 = vadd.f32 %v1018, %v1266
      %v1268 = vpop.f32.mrb[0].mxu0
      %1269 = vmatprep.mubr.f32.mxu0 0.0
      %1270 = vmatmul.mubr.f32.gmra.mrb[0].mxu0 %v970
      %v1271 = vpop.f32.mrb[0].mxu0
      %v1272 = vadd.f32 %v1018, %v1271
      %v1273 = vpop.f32.mrb[0].mxu0
      %1274 = vmatprep.mubr.f32.mxu0 0.0
      %1275 = vmatmul.mubr.f32.gmra.mrb[0].mxu0 %v971
      %v1276 = vpop.f32.mrb[0].mxu0
      %v1277 = vadd.f32 %v1018, %v1276
      %v1278 = vpop.f32.mrb[0].mxu0
      %1279 = vmatprep.mubr.f32.mxu0 0.0
      %1280 = vmatmul.mubr.f32.gmra.mrb[0].mxu0 %v972
      %v1281 = vpop.f32.mrb[0].mxu0
      %v1282 = vadd.f32 %v1018, %v1281
      %v1283 = vpop.f32.mrb[0].mxu0
      %1284 = vmatprep.mubr.f32.mxu0 0.0
      %1285 = vmatmul.mubr.f32.gmra.mrb[0].mxu0 %v973
      %v1286 = vpop.f32.mrb[0].mxu0
      %v1287 = vadd.f32 %v1018, %v1286
      %v1288 = vpop.f32.mrb[0].mxu0
      %1289 = vmatprep.mubr.f32.mxu0 0.0
      %1290 = vmatmul.mubr.f32.gmra.mrb[0].mxu0 %v974
      %v1291 = vpop.f32.mrb[0].mxu0
      %v1292 = vadd.f32 %v1018, %v1291
      %v1293 = vpop.f32.mrb[0].mxu0
      %1294 = vmatprep.mubr.f32.mxu0 0.0
      %1295 = vmatmul.mubr.f32.gmra.mrb[0].mxu0 %v975
      %v1296 = vpop.f32.mrb[0].mxu0
      %v1297 = vadd.f32 %v1018, %v1296
      %v1298 = vpop.f32.mrb[0].mxu0
      %1299 = vmatprep.mubr.f32.mxu0 0.0
      %1300 = vmatmul.mubr.f32.gmra.mrb[0].mxu0 %v976
      %v1301 = vpop.f32.mrb[0].mxu0
      %v1302 = vadd.f32 %v1018, %v1301
      %v1303 = vpop.f32.mrb[0].mxu0
      %1304 = vmatprep.mubr.f32.mxu0 0.0
      %1305 = vmatmul.mubr.f32.gmra.mrb[0].mxu0 %v977
      %v1306 = vpop.f32.mrb[0].mxu0
      %v1307 = vadd.f32 %v1018, %v1306
      %v1308 = vpop.f32.mrb[0].mxu0
      %1309 = vmatprep.mubr.f32.mxu0 0.0
      %1310 = vmatmul.mubr.f32.gmra.mrb[0].mxu0 %v978
      %v1311 = vpop.f32.mrb[0].mxu0
      %v1312 = vadd.f32 %v1018, %v1311
      %v1313 = vpop.f32.mrb[0].mxu0
      %1314 = vmatprep.mubr.f32.mxu0 0.0
      %1315 = vmatmul.mubr.f32.gmra.mrb[0].mxu0 %v979
      %v1316 = vpop.f32.mrb[0].mxu0
      %v1317 = vadd.f32 %v1018, %v1316
      %v1318 = vpop.f32.mrb[0].mxu0
      %1319 = vmatprep.mubr.f32.mxu0 0.0
      %1320 = vmatmul.mubr.f32.gmra.mrb[0].mxu0 %v980
      %v1321 = vpop.f32.mrb[0].mxu0
      %v1322 = vadd.f32 %v1018, %v1321
      %v1323 = vpop.f32.mrb[0].mxu0
      %1324 = vmatprep.mubr.f32.mxu0 0.0
      %1325 = vmatmul.mubr.f32.gmra.mrb[0].mxu0 %v981
      %v1326 = vpop.f32.mrb[0].mxu0
      %v1327 = vadd.f32 %v1018, %v1326
      %v1328 = vpop.f32.mrb[0].mxu0
      %1329 = vmatprep.mubr.f32.mxu0 0.0
      %1330 = vmatmul.mubr.f32.gmra.mrb[0].mxu0 %v982
      %v1331 = vpop.f32.mrb[0].mxu0
      %v1332 = vadd.f32 %v1018, %v1331
      %v1333 = vpop.f32.mrb[0].mxu0
      %1334 = vmatprep.mubr.f32.mxu0 0.0
      %1335 = vmatmul.mubr.f32.gmra.mrb[0].mxu0 %v983
      %v1336 = vpop.f32.mrb[0].mxu0
      %v1337 = vadd.f32 %v1018, %v1336
      %v1338 = vpop.f32.mrb[0].mxu0
      %1339 = vmatprep.mubr.f32.mxu0 0.0
      %1340 = vmatmul.mubr.f32.gmra.mrb[0].mxu0 %v984
      %v1341 = vpop.f32.mrb[0].mxu0
      %v1342 = vadd.f32 %v1018, %v1341
      %v1343 = vpop.f32.mrb[0].mxu0
      %1344 = vmatprep.mubr.f32.mxu0 0.0
      %1345 = vmatmul.mubr.f32.gmra.mrb[0].mxu0 %v985
      %v1346 = vpop.f32.mrb[0].mxu0
      %v1347 = vadd.f32 %v1018, %v1346
      %v1348 = vpop.f32.mrb[0].mxu0
      %1349 = vmatprep.mubr.f32.mxu0 0.0
      %1350 = vmatmul.mubr.f32.gmra.mrb[0].mxu0 %v986
      %v1351 = vpop.f32.mrb[0].mxu0
      %v1352 = vadd.f32 %v1018, %v1351
      %v1353 = vpop.f32.mrb[0].mxu0
      %1354 = vmatprep.mubr.f32.mxu0 0.0
      %1355 = vmatmul.mubr.f32.gmra.mrb[0].mxu0 %v987
      %v1356 = vpop.f32.mrb[0].mxu0
      %v1357 = vadd.f32 %v1018, %v1356
      %v1358 = vpop.f32.mrb[0].mxu0
      %1359 = vmatprep.mubr.f32.mxu0 0.0
      %1360 = vmatmul.mubr.f32.gmra.mrb[0].mxu0 %v988
      %v1361 = vpop.f32.mrb[0].mxu0
      %v1362 = vadd.f32 %v1018, %v1361
      %v1363 = vpop.f32.mrb[0].mxu0
      %1364 = vmatprep.mubr.f32.mxu0 0.0
      %1365 = vmatmul.mubr.f32.gmra.mrb[0].mxu0 %v989
      %v1366 = vpop.f32.mrb[0].mxu0
      %v1367 = vadd.f32 %v1018, %v1366
      %v1368 = vpop.f32.mrb[0].mxu0
      %1369 = vmatprep.mubr.f32.mxu0 0.0
      %1370 = vmatmul.mubr.f32.gmra.mrb[0].mxu0 %v990
      %v1371 = vpop.f32.mrb[0].mxu0
      %v1372 = vadd.f32 %v1018, %v1371
      %v1373 = vpop.f32.mrb[0].mxu0
      %1374 = vmatprep.mubr.f32.mxu0 0.0
      %1375 = vmatmul.mubr.f32.gmra.mrb[0].mxu0 %v991
      %v1376 = vpop.f32.mrb[0].mxu0
      %v1377 = vadd.f32 %v1018, %v1376
      %v1378 = vpop.f32.mrb[0].mxu0
      %1379 = vmatprep.mubr.f32.mxu0 0.0
      %1380 = vmatmul.mubr.f32.gmra.mrb[0].mxu0 %v992
      %v1381 = vpop.f32.mrb[0].mxu0
      %v1382 = vadd.f32 %v1018, %v1381
      %v1383 = vpop.f32.mrb[0].mxu0
      %1384 = vmatprep.mubr.f32.mxu0 0.0
      %1385 = vmatmul.mubr.f32.gmra.mrb[0].mxu0 %v993
      %v1386 = vpop.f32.mrb[0].mxu0
      %v1387 = vadd.f32 %v1018, %v1386
      %v1388 = vpop.f32.mrb[0].mxu0
      %1389 = vmatprep.mubr.f32.mxu0 0.0
      %1390 = vmatmul.mubr.f32.gmra.mrb[0].mxu0 %v994
      %v1391 = vpop.f32.mrb[0].mxu0
      %v1392 = vadd.f32 %v1018, %v1391
      %v1393 = vpop.f32.mrb[0].mxu0
      %1394 = vmatprep.mubr.f32.mxu0 0.0
      %1395 = vmatmul.mubr.f32.gmra.mrb[0].mxu0 %v995
      %v1396 = vpop.f32.mrb[0].mxu0
      %v1397 = vadd.f32 %v1018, %v1396
      %v1398 = vpop.f32.mrb[0].mxu0
      %1399 = vmatprep.mubr.f32.mxu0 0.0
      %1400 = vmatmul.mubr.f32.gmra.mrb[0].mxu0 %v996
      %v1401 = vpop.f32.mrb[0].mxu0
      %v1402 = vadd.f32 %v1018, %v1401
      %v1403 = vpop.f32.mrb[0].mxu0
      %1404 = vdwg.mxu0
      %v1405 = vmax.f32 %v1087, 0.0
      %v1406 = vmax.f32 %v1092, 0.0
      %v1407 = vmax.f32 %v1097, 0.0
      %v1408 = vmax.f32 %v1102, 0.0
      %v1409 = vmax.f32 %v1107, 0.0
      %v1410 = vmax.f32 %v1112, 0.0
      %v1411 = vmax.f32 %v1117, 0.0
      %v1412 = vmax.f32 %v1122, 0.0
      %v1413 = vmax.f32 %v1127, 0.0
      %v1414 = vmax.f32 %v1132, 0.0
      %v1415 = vmax.f32 %v1137, 0.0
      %v1416 = vmax.f32 %v1142, 0.0
      %v1417 = vmax.f32 %v1147, 0.0
      %v1418 = vmax.f32 %v1152, 0.0
      %v1419 = vmax.f32 %v1157, 0.0
      %v1420 = vmax.f32 %v1162, 0.0
      %v1421 = vmax.f32 %v1167, 0.0
      %v1422 = vmax.f32 %v1172, 0.0
      %v1423 = vmax.f32 %v1177, 0.0
      %v1424 = vmax.f32 %v1182, 0.0
      %v1425 = vmax.f32 %v1187, 0.0
      %v1426 = vmax.f32 %v1192, 0.0
      %v1427 = vmax.f32 %v1197, 0.0
      %v1428 = vmax.f32 %v1202, 0.0
      %v1429 = vmax.f32 %v1207, 0.0
      %v1430 = vmax.f32 %v1212, 0.0
      %v1431 = vmax.f32 %v1217, 0.0
      %v1432 = vmax.f32 %v1222, 0.0
      %v1433 = vmax.f32 %v1227, 0.0
      %v1434 = vmax.f32 %v1232, 0.0
      %v1435 = vmax.f32 %v1237, 0.0
      %v1436 = vmax.f32 %v1242, 0.0
      %v1437 = vmax.f32 %v1247, 0.0
      %v1438 = vmax.f32 %v1252, 0.0
      %v1439 = vmax.f32 %v1257, 0.0
      %v1440 = vmax.f32 %v1262, 0.0
      %v1441 = vmax.f32 %v1267, 0.0
      %v1442 = vmax.f32 %v1272, 0.0
      %v1443 = vmax.f32 %v1277, 0.0
      %v1444 = vmax.f32 %v1282, 0.0
      %v1445 = vmax.f32 %v1287, 0.0
      %v1446 = vmax.f32 %v1292, 0.0
      %v1447 = vmax.f32 %v1297, 0.0
      %v1448 = vmax.f32 %v1302, 0.0
      %v1449 = vmax.f32 %v1307, 0.0
      %v1450 = vmax.f32 %v1312, 0.0
      %v1451 = vmax.f32 %v1317, 0.0
      %v1452 = vmax.f32 %v1322, 0.0
      %v1453 = vmax.f32 %v1327, 0.0
      %v1454 = vmax.f32 %v1332, 0.0
      %v1455 = vmax.f32 %v1337, 0.0
      %v1456 = vmax.f32 %v1342, 0.0
      %v1457 = vmax.f32 %v1347, 0.0
      %v1458 = vmax.f32 %v1352, 0.0
      %v1459 = vmax.f32 %v1357, 0.0
      %v1460 = vmax.f32 %v1362, 0.0
      %v1461 = vmax.f32 %v1367, 0.0
      %v1462 = vmax.f32 %v1372, 0.0
      %v1463 = vmax.f32 %v1377, 0.0
      %v1464 = vmax.f32 %v1382, 0.0
      %v1465 = vmax.f32 %v1387, 0.0
      %v1466 = vmax.f32 %v1392, 0.0
      %v1467 = vmax.f32 %v1397, 0.0
      %v1468 = vmax.f32 %v1402, 0.0
      %v1469 = vld [vmem:[%s5] sm:$0xff]
      %v1470 = vld [vmem:[%s5 + $0x8] sm:$0xff]
      %v1471 = vld [vmem:[%s5 + $0x10] sm:$0xff]
      %v1472 = vld [vmem:[%s5 + $0x18] sm:$0xff]
      %v1473 = vld [vmem:[%s5 + $0x20] sm:$0xff]
      %v1474 = vld [vmem:[%s5 + $0x28] sm:$0xff]
      %v1475 = vld [vmem:[%s5 + $0x30] sm:$0xff]
      %v1476 = vld [vmem:[%s5 + $0x38] sm:$0xff]
      %v1477 = vld [vmem:[%s5 + $0x40] sm:$0xff]
      %v1478 = vld [vmem:[%s5 + $0x48] sm:$0xff]
      %v1479 = vld [vmem:[%s5 + $0x50] sm:$0xff]
      %v1480 = vld [vmem:[%s5 + $0x58] sm:$0xff]
      %v1481 = vld [vmem:[%s5 + $0x60] sm:$0xff]
      %v1482 = vld [vmem:[%s5 + $0x68] sm:$0xff]
      %v1483 = vld [vmem:[%s5 + $0x70] sm:$0xff]
      %v1484 = vld [vmem:[%s5 + $0x78] sm:$0xff]
      %v1485 = vld [vmem:[%s6] sm:$0x1]
      %v1487 = vlaneseq
      %v1488 = vshrl.u32 %v1487, 7
      %v1489 = vsub.s32 0, %v1488
      %v1490 = vrot.slane %v1485, %v1489
      %1492 = vmatprep.subr.mxu0 0.0
      %1493 = vmatpush1.msra.mxu0 %v1469
      %1494 = vmatprep.subr.mxu0 0.0
      %1495 = vmatpush1.msra.mxu0 %v1470
      %1496 = vmatprep.subr.mxu0 0.0
      %1497 = vmatpush1.msra.mxu0 %v1471
      %1498 = vmatprep.subr.mxu0 0.0
      %1499 = vmatpush1.msra.mxu0 %v1472
      %1500 = vmatprep.subr.mxu0 0.0
      %1501 = vmatpush1.msra.mxu0 %v1473
      %1502 = vmatprep.subr.mxu0 0.0
      %1503 = vmatpush1.msra.mxu0 %v1474
      %1504 = vmatprep.subr.mxu0 0.0
      %1505 = vmatpush1.msra.mxu0 %v1475
      %1506 = vmatprep.subr.mxu0 0.0
      %1507 = vmatpush1.msra.mxu0 %v1476
      %1508 = vmatprep.subr.mxu0 0.0
      %1509 = vmatpush1.msra.mxu0 %v1477
      %1510 = vmatprep.subr.mxu0 0.0
      %1511 = vmatpush1.msra.mxu0 %v1478
      %1512 = vmatprep.subr.mxu0 0.0
      %1513 = vmatpush1.msra.mxu0 %v1479
      %1514 = vmatprep.subr.mxu0 0.0
      %1515 = vmatpush1.msra.mxu0 %v1480
      %1516 = vmatprep.subr.mxu0 0.0
      %1517 = vmatpush1.msra.mxu0 %v1481
      %1518 = vmatprep.subr.mxu0 0.0
      %1519 = vmatpush1.msra.mxu0 %v1482
      %1520 = vmatprep.subr.mxu0 0.0
      %1521 = vmatpush1.msra.mxu0 %v1483
      %1522 = vmatprep.subr.mxu0 0.0
      %1523 = vmatpush1.msra.mxu0 %v1484
      %1524 = vmatprep.subr.mxu0 0.0
      %1525 = vmatpush1.msra.mxu0 0.0
      %1526 = vmatprep.subr.mxu0 0.0
      %1527 = vmatpush1.msra.mxu0 0.0
      %1528 = vmatprep.subr.mxu0 0.0
      %1529 = vmatpush1.msra.mxu0 0.0
      %1530 = vmatprep.subr.mxu0 0.0
      %1531 = vmatpush1.msra.mxu0 0.0
      %1532 = vmatprep.subr.mxu0 0.0
      %1533 = vmatpush1.msra.mxu0 0.0
      %1534 = vmatprep.subr.mxu0 0.0
      %1535 = vmatpush1.msra.mxu0 0.0
      %1536 = vmatprep.subr.mxu0 0.0
      %1537 = vmatpush1.msra.mxu0 0.0
      %1538 = vmatprep.subr.mxu0 0.0
      %1539 = vmatpush1.msra.mxu0 0.0
      %1540 = vmatprep.subr.mxu0 0.0
      %1541 = vmatpush1.msra.mxu0 0.0
      %1542 = vmatprep.subr.mxu0 0.0
      %1543 = vmatpush1.msra.mxu0 0.0
      %1544 = vmatprep.subr.mxu0 0.0
      %1545 = vmatpush1.msra.mxu0 0.0
      %1546 = vmatprep.subr.mxu0 0.0
      %1547 = vmatpush1.msra.mxu0 0.0
      %1548 = vmatprep.subr.mxu0 0.0
      %1549 = vmatpush1.msra.mxu0 0.0
      %1550 = vmatprep.subr.mxu0 0.0
      %1551 = vmatpush1.msra.mxu0 0.0
      %1552 = vmatprep.subr.mxu0 0.0
      %1553 = vmatpush1.msra.mxu0 0.0
      %1554 = vmatprep.subr.mxu0 0.0
      %1555 = vmatpush1.msra.mxu0 0.0
      %1556 = vmatprep.mubr.f32.mxu0 0.0
      %1557 = vmatmul.mubr.f32.gmra.mrb[0].mxu0 %v1405
      %v1558 = vpop.f32.mrb[0].mxu0
      %v1559 = vadd.f32 %v1490, %v1558
      %v1560 = vpop.f32.mrb[0].mxu0
      %1561 = vmatprep.mubr.f32.mxu0 0.0
      %1562 = vmatmul.mubr.f32.gmra.mrb[0].mxu0 %v1406
      %v1563 = vpop.f32.mrb[0].mxu0
      %v1564 = vadd.f32 %v1490, %v1563
      %v1565 = vpop.f32.mrb[0].mxu0
      %1566 = vmatprep.mubr.f32.mxu0 0.0
      %1567 = vmatmul.mubr.f32.gmra.mrb[0].mxu0 %v1407
      %v1568 = vpop.f32.mrb[0].mxu0
      %v1569 = vadd.f32 %v1490, %v1568
      %v1570 = vpop.f32.mrb[0].mxu0
      %1571 = vmatprep.mubr.f32.mxu0 0.0
      %1572 = vmatmul.mubr.f32.gmra.mrb[0].mxu0 %v1408
      %v1573 = vpop.f32.mrb[0].mxu0
      %v1574 = vadd.f32 %v1490, %v1573
      %v1575 = vpop.f32.mrb[0].mxu0
      %1576 = vmatprep.mubr.f32.mxu0 0.0
      %1577 = vmatmul.mubr.f32.gmra.mrb[0].mxu0 %v1409
      %v1578 = vpop.f32.mrb[0].mxu0
      %v1579 = vadd.f32 %v1490, %v1578
      %v1580 = vpop.f32.mrb[0].mxu0
      %1581 = vmatprep.mubr.f32.mxu0 0.0
      %1582 = vmatmul.mubr.f32.gmra.mrb[0].mxu0 %v1410
      %v1583 = vpop.f32.mrb[0].mxu0
      %v1584 = vadd.f32 %v1490, %v1583
      %v1585 = vpop.f32.mrb[0].mxu0
      %1586 = vmatprep.mubr.f32.mxu0 0.0
      %1587 = vmatmul.mubr.f32.gmra.mrb[0].mxu0 %v1411
      %v1588 = vpop.f32.mrb[0].mxu0
      %v1589 = vadd.f32 %v1490, %v1588
      %v1590 = vpop.f32.mrb[0].mxu0
      %1591 = vmatprep.mubr.f32.mxu0 0.0
      %1592 = vmatmul.mubr.f32.gmra.mrb[0].mxu0 %v1412
      %v1593 = vpop.f32.mrb[0].mxu0
      %v1594 = vadd.f32 %v1490, %v1593
      %v1595 = vpop.f32.mrb[0].mxu0
      %1596 = vmatprep.mubr.f32.mxu0 0.0
      %1597 = vmatmul.mubr.f32.gmra.mrb[0].mxu0 %v1413
      %v1598 = vpop.f32.mrb[0].mxu0
      %v1599 = vadd.f32 %v1490, %v1598
      %v1600 = vpop.f32.mrb[0].mxu0
      %1601 = vmatprep.mubr.f32.mxu0 0.0
      %1602 = vmatmul.mubr.f32.gmra.mrb[0].mxu0 %v1414
      %v1603 = vpop.f32.mrb[0].mxu0
      %v1604 = vadd.f32 %v1490, %v1603
      %v1605 = vpop.f32.mrb[0].mxu0
      %1606 = vmatprep.mubr.f32.mxu0 0.0
      %1607 = vmatmul.mubr.f32.gmra.mrb[0].mxu0 %v1415
      %v1608 = vpop.f32.mrb[0].mxu0
      %v1609 = vadd.f32 %v1490, %v1608
      %v1610 = vpop.f32.mrb[0].mxu0
      %1611 = vmatprep.mubr.f32.mxu0 0.0
      %1612 = vmatmul.mubr.f32.gmra.mrb[0].mxu0 %v1416
      %v1613 = vpop.f32.mrb[0].mxu0
      %v1614 = vadd.f32 %v1490, %v1613
      %v1615 = vpop.f32.mrb[0].mxu0
      %1616 = vmatprep.mubr.f32.mxu0 0.0
      %1617 = vmatmul.mubr.f32.gmra.mrb[0].mxu0 %v1417
      %v1618 = vpop.f32.mrb[0].mxu0
      %v1619 = vadd.f32 %v1490, %v1618
      %v1620 = vpop.f32.mrb[0].mxu0
      %1621 = vmatprep.mubr.f32.mxu0 0.0
      %1622 = vmatmul.mubr.f32.gmra.mrb[0].mxu0 %v1418
      %v1623 = vpop.f32.mrb[0].mxu0
      %v1624 = vadd.f32 %v1490, %v1623
      %v1625 = vpop.f32.mrb[0].mxu0
      %1626 = vmatprep.mubr.f32.mxu0 0.0
      %1627 = vmatmul.mubr.f32.gmra.mrb[0].mxu0 %v1419
      %v1628 = vpop.f32.mrb[0].mxu0
      %v1629 = vadd.f32 %v1490, %v1628
      %v1630 = vpop.f32.mrb[0].mxu0
      %1631 = vmatprep.mubr.f32.mxu0 0.0
      %1632 = vmatmul.mubr.f32.gmra.mrb[0].mxu0 %v1420
      %v1633 = vpop.f32.mrb[0].mxu0
      %v1634 = vadd.f32 %v1490, %v1633
      %v1635 = vpop.f32.mrb[0].mxu0
      %1636 = vmatprep.mubr.f32.mxu0 0.0
      %1637 = vmatmul.mubr.f32.gmra.mrb[0].mxu0 %v1421
      %v1638 = vpop.f32.mrb[0].mxu0
      %v1639 = vadd.f32 %v1490, %v1638
      %v1640 = vpop.f32.mrb[0].mxu0
      %1641 = vmatprep.mubr.f32.mxu0 0.0
      %1642 = vmatmul.mubr.f32.gmra.mrb[0].mxu0 %v1422
      %v1643 = vpop.f32.mrb[0].mxu0
      %v1644 = vadd.f32 %v1490, %v1643
      %v1645 = vpop.f32.mrb[0].mxu0
      %1646 = vmatprep.mubr.f32.mxu0 0.0
      %1647 = vmatmul.mubr.f32.gmra.mrb[0].mxu0 %v1423
      %v1648 = vpop.f32.mrb[0].mxu0
      %v1649 = vadd.f32 %v1490, %v1648
      %v1650 = vpop.f32.mrb[0].mxu0
      %1651 = vmatprep.mubr.f32.mxu0 0.0
      %1652 = vmatmul.mubr.f32.gmra.mrb[0].mxu0 %v1424
      %v1653 = vpop.f32.mrb[0].mxu0
      %v1654 = vadd.f32 %v1490, %v1653
      %v1655 = vpop.f32.mrb[0].mxu0
      %1656 = vmatprep.mubr.f32.mxu0 0.0
      %1657 = vmatmul.mubr.f32.gmra.mrb[0].mxu0 %v1425
      %v1658 = vpop.f32.mrb[0].mxu0
      %v1659 = vadd.f32 %v1490, %v1658
      %v1660 = vpop.f32.mrb[0].mxu0
      %1661 = vmatprep.mubr.f32.mxu0 0.0
      %1662 = vmatmul.mubr.f32.gmra.mrb[0].mxu0 %v1426
      %v1663 = vpop.f32.mrb[0].mxu0
      %v1664 = vadd.f32 %v1490, %v1663
      %v1665 = vpop.f32.mrb[0].mxu0
      %1666 = vmatprep.mubr.f32.mxu0 0.0
      %1667 = vmatmul.mubr.f32.gmra.mrb[0].mxu0 %v1427
      %v1668 = vpop.f32.mrb[0].mxu0
      %v1669 = vadd.f32 %v1490, %v1668
      %v1670 = vpop.f32.mrb[0].mxu0
      %1671 = vmatprep.mubr.f32.mxu0 0.0
      %1672 = vmatmul.mubr.f32.gmra.mrb[0].mxu0 %v1428
      %v1673 = vpop.f32.mrb[0].mxu0
      %v1674 = vadd.f32 %v1490, %v1673
      %v1675 = vpop.f32.mrb[0].mxu0
      %1676 = vmatprep.mubr.f32.mxu0 0.0
      %1677 = vmatmul.mubr.f32.gmra.mrb[0].mxu0 %v1429
      %v1678 = vpop.f32.mrb[0].mxu0
      %v1679 = vadd.f32 %v1490, %v1678
      %v1680 = vpop.f32.mrb[0].mxu0
      %1681 = vmatprep.mubr.f32.mxu0 0.0
      %1682 = vmatmul.mubr.f32.gmra.mrb[0].mxu0 %v1430
      %v1683 = vpop.f32.mrb[0].mxu0
      %v1684 = vadd.f32 %v1490, %v1683
      %v1685 = vpop.f32.mrb[0].mxu0
      %1686 = vmatprep.mubr.f32.mxu0 0.0
      %1687 = vmatmul.mubr.f32.gmra.mrb[0].mxu0 %v1431
      %v1688 = vpop.f32.mrb[0].mxu0
      %v1689 = vadd.f32 %v1490, %v1688
      %v1690 = vpop.f32.mrb[0].mxu0
      %1691 = vmatprep.mubr.f32.mxu0 0.0
      %1692 = vmatmul.mubr.f32.gmra.mrb[0].mxu0 %v1432
      %v1693 = vpop.f32.mrb[0].mxu0
      %v1694 = vadd.f32 %v1490, %v1693
      %v1695 = vpop.f32.mrb[0].mxu0
      %1696 = vmatprep.mubr.f32.mxu0 0.0
      %1697 = vmatmul.mubr.f32.gmra.mrb[0].mxu0 %v1433
      %v1698 = vpop.f32.mrb[0].mxu0
      %v1699 = vadd.f32 %v1490, %v1698
      %v1700 = vpop.f32.mrb[0].mxu0
      %1701 = vmatprep.mubr.f32.mxu0 0.0
      %1702 = vmatmul.mubr.f32.gmra.mrb[0].mxu0 %v1434
      %v1703 = vpop.f32.mrb[0].mxu0
      %v1704 = vadd.f32 %v1490, %v1703
      %v1705 = vpop.f32.mrb[0].mxu0
      %1706 = vmatprep.mubr.f32.mxu0 0.0
      %1707 = vmatmul.mubr.f32.gmra.mrb[0].mxu0 %v1435
      %v1708 = vpop.f32.mrb[0].mxu0
      %v1709 = vadd.f32 %v1490, %v1708
      %v1710 = vpop.f32.mrb[0].mxu0
      %1711 = vmatprep.mubr.f32.mxu0 0.0
      %1712 = vmatmul.mubr.f32.gmra.mrb[0].mxu0 %v1436
      %v1713 = vpop.f32.mrb[0].mxu0
      %v1714 = vadd.f32 %v1490, %v1713
      %v1715 = vpop.f32.mrb[0].mxu0
      %1716 = vmatprep.mubr.f32.mxu0 0.0
      %1717 = vmatmul.mubr.f32.gmra.mrb[0].mxu0 %v1437
      %v1718 = vpop.f32.mrb[0].mxu0
      %v1719 = vadd.f32 %v1490, %v1718
      %v1720 = vpop.f32.mrb[0].mxu0
      %1721 = vmatprep.mubr.f32.mxu0 0.0
      %1722 = vmatmul.mubr.f32.gmra.mrb[0].mxu0 %v1438
      %v1723 = vpop.f32.mrb[0].mxu0
      %v1724 = vadd.f32 %v1490, %v1723
      %v1725 = vpop.f32.mrb[0].mxu0
      %1726 = vmatprep.mubr.f32.mxu0 0.0
      %1727 = vmatmul.mubr.f32.gmra.mrb[0].mxu0 %v1439
      %v1728 = vpop.f32.mrb[0].mxu0
      %v1729 = vadd.f32 %v1490, %v1728
      %v1730 = vpop.f32.mrb[0].mxu0
      %1731 = vmatprep.mubr.f32.mxu0 0.0
      %1732 = vmatmul.mubr.f32.gmra.mrb[0].mxu0 %v1440
      %v1733 = vpop.f32.mrb[0].mxu0
      %v1734 = vadd.f32 %v1490, %v1733
      %v1735 = vpop.f32.mrb[0].mxu0
      %1736 = vmatprep.mubr.f32.mxu0 0.0
      %1737 = vmatmul.mubr.f32.gmra.mrb[0].mxu0 %v1441
      %v1738 = vpop.f32.mrb[0].mxu0
      %v1739 = vadd.f32 %v1490, %v1738
      %v1740 = vpop.f32.mrb[0].mxu0
      %1741 = vmatprep.mubr.f32.mxu0 0.0
      %1742 = vmatmul.mubr.f32.gmra.mrb[0].mxu0 %v1442
      %v1743 = vpop.f32.mrb[0].mxu0
      %v1744 = vadd.f32 %v1490, %v1743
      %v1745 = vpop.f32.mrb[0].mxu0
      %1746 = vmatprep.mubr.f32.mxu0 0.0
      %1747 = vmatmul.mubr.f32.gmra.mrb[0].mxu0 %v1443
      %v1748 = vpop.f32.mrb[0].mxu0
      %v1749 = vadd.f32 %v1490, %v1748
      %v1750 = vpop.f32.mrb[0].mxu0
      %1751 = vmatprep.mubr.f32.mxu0 0.0
      %1752 = vmatmul.mubr.f32.gmra.mrb[0].mxu0 %v1444
      %v1753 = vpop.f32.mrb[0].mxu0
      %v1754 = vadd.f32 %v1490, %v1753
      %v1755 = vpop.f32.mrb[0].mxu0
      %1756 = vmatprep.mubr.f32.mxu0 0.0
      %1757 = vmatmul.mubr.f32.gmra.mrb[0].mxu0 %v1445
      %v1758 = vpop.f32.mrb[0].mxu0
      %v1759 = vadd.f32 %v1490, %v1758
      %v1760 = vpop.f32.mrb[0].mxu0
      %1761 = vmatprep.mubr.f32.mxu0 0.0
      %1762 = vmatmul.mubr.f32.gmra.mrb[0].mxu0 %v1446
      %v1763 = vpop.f32.mrb[0].mxu0
      %v1764 = vadd.f32 %v1490, %v1763
      %v1765 = vpop.f32.mrb[0].mxu0
      %1766 = vmatprep.mubr.f32.mxu0 0.0
      %1767 = vmatmul.mubr.f32.gmra.mrb[0].mxu0 %v1447
      %v1768 = vpop.f32.mrb[0].mxu0
      %v1769 = vadd.f32 %v1490, %v1768
      %v1770 = vpop.f32.mrb[0].mxu0
      %1771 = vmatprep.mubr.f32.mxu0 0.0
      %1772 = vmatmul.mubr.f32.gmra.mrb[0].mxu0 %v1448
      %v1773 = vpop.f32.mrb[0].mxu0
      %v1774 = vadd.f32 %v1490, %v1773
      %v1775 = vpop.f32.mrb[0].mxu0
      %1776 = vmatprep.mubr.f32.mxu0 0.0
      %1777 = vmatmul.mubr.f32.gmra.mrb[0].mxu0 %v1449
      %v1778 = vpop.f32.mrb[0].mxu0
      %v1779 = vadd.f32 %v1490, %v1778
      %v1780 = vpop.f32.mrb[0].mxu0
      %1781 = vmatprep.mubr.f32.mxu0 0.0
      %1782 = vmatmul.mubr.f32.gmra.mrb[0].mxu0 %v1450
      %v1783 = vpop.f32.mrb[0].mxu0
      %v1784 = vadd.f32 %v1490, %v1783
      %v1785 = vpop.f32.mrb[0].mxu0
      %1786 = vmatprep.mubr.f32.mxu0 0.0
      %1787 = vmatmul.mubr.f32.gmra.mrb[0].mxu0 %v1451
      %v1788 = vpop.f32.mrb[0].mxu0
      %v1789 = vadd.f32 %v1490, %v1788
      %v1790 = vpop.f32.mrb[0].mxu0
      %1791 = vmatprep.mubr.f32.mxu0 0.0
      %1792 = vmatmul.mubr.f32.gmra.mrb[0].mxu0 %v1452
      %v1793 = vpop.f32.mrb[0].mxu0
      %v1794 = vadd.f32 %v1490, %v1793
      %v1795 = vpop.f32.mrb[0].mxu0
      %1796 = vmatprep.mubr.f32.mxu0 0.0
      %1797 = vmatmul.mubr.f32.gmra.mrb[0].mxu0 %v1453
      %v1798 = vpop.f32.mrb[0].mxu0
      %v1799 = vadd.f32 %v1490, %v1798
      %v1800 = vpop.f32.mrb[0].mxu0
      %1801 = vmatprep.mubr.f32.mxu0 0.0
      %1802 = vmatmul.mubr.f32.gmra.mrb[0].mxu0 %v1454
      %v1803 = vpop.f32.mrb[0].mxu0
      %v1804 = vadd.f32 %v1490, %v1803
      %v1805 = vpop.f32.mrb[0].mxu0
      %1806 = vmatprep.mubr.f32.mxu0 0.0
      %1807 = vmatmul.mubr.f32.gmra.mrb[0].mxu0 %v1455
      %v1808 = vpop.f32.mrb[0].mxu0
      %v1809 = vadd.f32 %v1490, %v1808
      %v1810 = vpop.f32.mrb[0].mxu0
      %1811 = vmatprep.mubr.f32.mxu0 0.0
      %1812 = vmatmul.mubr.f32.gmra.mrb[0].mxu0 %v1456
      %v1813 = vpop.f32.mrb[0].mxu0
      %v1814 = vadd.f32 %v1490, %v1813
      %v1815 = vpop.f32.mrb[0].mxu0
      %1816 = vmatprep.mubr.f32.mxu0 0.0
      %1817 = vmatmul.mubr.f32.gmra.mrb[0].mxu0 %v1457
      %v1818 = vpop.f32.mrb[0].mxu0
      %v1819 = vadd.f32 %v1490, %v1818
      %v1820 = vpop.f32.mrb[0].mxu0
      %1821 = vmatprep.mubr.f32.mxu0 0.0
      %1822 = vmatmul.mubr.f32.gmra.mrb[0].mxu0 %v1458
      %v1823 = vpop.f32.mrb[0].mxu0
      %v1824 = vadd.f32 %v1490, %v1823
      %v1825 = vpop.f32.mrb[0].mxu0
      %1826 = vmatprep.mubr.f32.mxu0 0.0
      %1827 = vmatmul.mubr.f32.gmra.mrb[0].mxu0 %v1459
      %v1828 = vpop.f32.mrb[0].mxu0
      %v1829 = vadd.f32 %v1490, %v1828
      %v1830 = vpop.f32.mrb[0].mxu0
      %1831 = vmatprep.mubr.f32.mxu0 0.0
      %1832 = vmatmul.mubr.f32.gmra.mrb[0].mxu0 %v1460
      %v1833 = vpop.f32.mrb[0].mxu0
      %v1834 = vadd.f32 %v1490, %v1833
      %v1835 = vpop.f32.mrb[0].mxu0
      %1836 = vmatprep.mubr.f32.mxu0 0.0
      %1837 = vmatmul.mubr.f32.gmra.mrb[0].mxu0 %v1461
      %v1838 = vpop.f32.mrb[0].mxu0
      %v1839 = vadd.f32 %v1490, %v1838
      %v1840 = vpop.f32.mrb[0].mxu0
      %1841 = vmatprep.mubr.f32.mxu0 0.0
      %1842 = vmatmul.mubr.f32.gmra.mrb[0].mxu0 %v1462
      %v1843 = vpop.f32.mrb[0].mxu0
      %v1844 = vadd.f32 %v1490, %v1843
      %v1845 = vpop.f32.mrb[0].mxu0
      %1846 = vmatprep.mubr.f32.mxu0 0.0
      %1847 = vmatmul.mubr.f32.gmra.mrb[0].mxu0 %v1463
      %v1848 = vpop.f32.mrb[0].mxu0
      %v1849 = vadd.f32 %v1490, %v1848
      %v1850 = vpop.f32.mrb[0].mxu0
      %1851 = vmatprep.mubr.f32.mxu0 0.0
      %1852 = vmatmul.mubr.f32.gmra.mrb[0].mxu0 %v1464
      %v1853 = vpop.f32.mrb[0].mxu0
      %v1854 = vadd.f32 %v1490, %v1853
      %v1855 = vpop.f32.mrb[0].mxu0
      %1856 = vmatprep.mubr.f32.mxu0 0.0
      %1857 = vmatmul.mubr.f32.gmra.mrb[0].mxu0 %v1465
      %v1858 = vpop.f32.mrb[0].mxu0
      %v1859 = vadd.f32 %v1490, %v1858
      %v1860 = vpop.f32.mrb[0].mxu0
      %1861 = vmatprep.mubr.f32.mxu0 0.0
      %1862 = vmatmul.mubr.f32.gmra.mrb[0].mxu0 %v1466
      %v1863 = vpop.f32.mrb[0].mxu0
      %v1864 = vadd.f32 %v1490, %v1863
      %v1865 = vpop.f32.mrb[0].mxu0
      %1866 = vmatprep.mubr.f32.mxu0 0.0
      %1867 = vmatmul.mubr.f32.gmra.mrb[0].mxu0 %v1467
      %v1868 = vpop.f32.mrb[0].mxu0
      %v1869 = vadd.f32 %v1490, %v1868
      %v1870 = vpop.f32.mrb[0].mxu0
      %1871 = vmatprep.mubr.f32.mxu0 0.0
      %1872 = vmatmul.mubr.f32.gmra.mrb[0].mxu0 %v1468
      %v1873 = vpop.f32.mrb[0].mxu0
      %v1874 = vadd.f32 %v1490, %v1873
      %v1875 = vpop.f32.mrb[0].mxu0
      %1876 = vdwg.mxu0
      %vm1877 = vcmask 64512
      %1878 = vst.msk [vmem:[%s280] sm:$0xff] %vm1877, %v1559
      %1879 = vst.msk [vmem:[%s280 + $0x8] sm:$0xff] %vm1877, %v1564
      %1880 = vst.msk [vmem:[%s280 + $0x10] sm:$0xff] %vm1877, %v1569
      %1881 = vst.msk [vmem:[%s280 + $0x18] sm:$0xff] %vm1877, %v1574
      %1882 = vst.msk [vmem:[%s280 + $0x20] sm:$0xff] %vm1877, %v1579
      %1883 = vst.msk [vmem:[%s280 + $0x28] sm:$0xff] %vm1877, %v1584
      %1884 = vst.msk [vmem:[%s280 + $0x30] sm:$0xff] %vm1877, %v1589
      %1885 = vst.msk [vmem:[%s280 + $0x38] sm:$0xff] %vm1877, %v1594
      %1886 = vst.msk [vmem:[%s280 + $0x40] sm:$0xff] %vm1877, %v1599
      %1887 = vst.msk [vmem:[%s280 + $0x48] sm:$0xff] %vm1877, %v1604
      %1888 = vst.msk [vmem:[%s280 + $0x50] sm:$0xff] %vm1877, %v1609
      %1889 = vst.msk [vmem:[%s280 + $0x58] sm:$0xff] %vm1877, %v1614
      %1890 = vst.msk [vmem:[%s280 + $0x60] sm:$0xff] %vm1877, %v1619
      %1891 = vst.msk [vmem:[%s280 + $0x68] sm:$0xff] %vm1877, %v1624
      %1892 = vst.msk [vmem:[%s280 + $0x70] sm:$0xff] %vm1877, %v1629
      %1893 = vst.msk [vmem:[%s280 + $0x78] sm:$0xff] %vm1877, %v1634
      %1894 = vst.msk [vmem:[%s280 + $0x80] sm:$0xff] %vm1877, %v1639
      %1895 = vst.msk [vmem:[%s280 + $0x88] sm:$0xff] %vm1877, %v1644
      %1896 = vst.msk [vmem:[%s280 + $0x90] sm:$0xff] %vm1877, %v1649
      %1897 = vst.msk [vmem:[%s280 + $0x98] sm:$0xff] %vm1877, %v1654
      %1898 = vst.msk [vmem:[%s280 + $0xa0] sm:$0xff] %vm1877, %v1659
      %1899 = vst.msk [vmem:[%s280 + $0xa8] sm:$0xff] %vm1877, %v1664
      %1900 = vst.msk [vmem:[%s280 + $0xb0] sm:$0xff] %vm1877, %v1669
      %1901 = vst.msk [vmem:[%s280 + $0xb8] sm:$0xff] %vm1877, %v1674
      %1902 = vst.msk [vmem:[%s280 + $0xc0] sm:$0xff] %vm1877, %v1679
      %1903 = vst.msk [vmem:[%s280 + $0xc8] sm:$0xff] %vm1877, %v1684
      %1904 = vst.msk [vmem:[%s280 + $0xd0] sm:$0xff] %vm1877, %v1689
      %1905 = vst.msk [vmem:[%s280 + $0xd8] sm:$0xff] %vm1877, %v1694
      %1906 = vst.msk [vmem:[%s280 + $0xe0] sm:$0xff] %vm1877, %v1699
      %1907 = vst.msk [vmem:[%s280 + $0xe8] sm:$0xff] %vm1877, %v1704
      %1908 = vst.msk [vmem:[%s280 + $0xf0] sm:$0xff] %vm1877, %v1709
      %1909 = vst.msk [vmem:[%s280 + $0xf8] sm:$0xff] %vm1877, %v1714
      %1910 = vst.msk [vmem:[%s280 + $0x100] sm:$0xff] %vm1877, %v1719
      %1911 = vst.msk [vmem:[%s280 + $0x108] sm:$0xff] %vm1877, %v1724
      %1912 = vst.msk [vmem:[%s280 + $0x110] sm:$0xff] %vm1877, %v1729
      %1913 = vst.msk [vmem:[%s280 + $0x118] sm:$0xff] %vm1877, %v1734
      %1914 = vst.msk [vmem:[%s280 + $0x120] sm:$0xff] %vm1877, %v1739
      %1915 = vst.msk [vmem:[%s280 + $0x128] sm:$0xff] %vm1877, %v1744
      %1916 = vst.msk [vmem:[%s280 + $0x130] sm:$0xff] %vm1877, %v1749
      %1917 = vst.msk [vmem:[%s280 + $0x138] sm:$0xff] %vm1877, %v1754
      %1918 = vst.msk [vmem:[%s280 + $0x140] sm:$0xff] %vm1877, %v1759
      %1919 = vst.msk [vmem:[%s280 + $0x148] sm:$0xff] %vm1877, %v1764
      %1920 = vst.msk [vmem:[%s280 + $0x150] sm:$0xff] %vm1877, %v1769
      %1921 = vst.msk [vmem:[%s280 + $0x158] sm:$0xff] %vm1877, %v1774
      %1922 = vst.msk [vmem:[%s280 + $0x160] sm:$0xff] %vm1877, %v1779
      %1923 = vst.msk [vmem:[%s280 + $0x168] sm:$0xff] %vm1877, %v1784
      %1924 = vst.msk [vmem:[%s280 + $0x170] sm:$0xff] %vm1877, %v1789
      %1925 = vst.msk [vmem:[%s280 + $0x178] sm:$0xff] %vm1877, %v1794
      %1926 = vst.msk [vmem:[%s280 + $0x180] sm:$0xff] %vm1877, %v1799
      %1927 = vst.msk [vmem:[%s280 + $0x188] sm:$0xff] %vm1877, %v1804
      %1928 = vst.msk [vmem:[%s280 + $0x190] sm:$0xff] %vm1877, %v1809
      %1929 = vst.msk [vmem:[%s280 + $0x198] sm:$0xff] %vm1877, %v1814
      %1930 = vst.msk [vmem:[%s280 + $0x1a0] sm:$0xff] %vm1877, %v1819
      %1931 = vst.msk [vmem:[%s280 + $0x1a8] sm:$0xff] %vm1877, %v1824
      %1932 = vst.msk [vmem:[%s280 + $0x1b0] sm:$0xff] %vm1877, %v1829
      %1933 = vst.msk [vmem:[%s280 + $0x1b8] sm:$0xff] %vm1877, %v1834
      %1934 = vst.msk [vmem:[%s280 + $0x1c0] sm:$0xff] %vm1877, %v1839
      %1935 = vst.msk [vmem:[%s280 + $0x1c8] sm:$0xff] %vm1877, %v1844
      %1936 = vst.msk [vmem:[%s280 + $0x1d0] sm:$0xff] %vm1877, %v1849
      %1937 = vst.msk [vmem:[%s280 + $0x1d8] sm:$0xff] %vm1877, %v1854
      %1938 = vst.msk [vmem:[%s280 + $0x1e0] sm:$0xff] %vm1877, %v1859
      %1939 = vst.msk [vmem:[%s280 + $0x1e8] sm:$0xff] %vm1877, %v1864
      %1940 = vst.msk [vmem:[%s280 + $0x1f0] sm:$0xff] %vm1877, %v1869
      %1941 = vst.msk [vmem:[%s280 + $0x1f8] sm:$0xff] %vm1877, %v1874
      %s1942 = smul.u32 64, %s18
      %p1943 = scmp.lt.s32.totalorder %s1942, 255
      %s1944 = scalar_select %p1943, %s1942, 255
      %s1945 = smul.addr %s1944, 8
      %s1946 = scalar_lea.vmem %s7, %s1945
      // Predicated region
      $region49: #{network_forward.1} parent=47 // pred_check
        %p1947 = pneg %p188
      $region50: #{network_forward.1} parent=47 // pred_check_branch
        %1949 = sbr.rel (%p1947) target = $region52
      $region51: #{network_forward.1} parent=47 // pred_region
        %s1950 = smul.u32 64, %s18
      $region52: #{network_forward.1} parent=47 // pred_fallthru
        _
    $region48: #{network_forward.1} parent=5 // pred_fallthru
      _
    %p1951 = scmp.le.s32.totalorder 2, %s13
    // Predicated region
    $region53: #{network_forward.1} parent=5 // pred_check
      %p1952 = pneg %p1951
    $region54: #{network_forward.1} parent=5 // pred_check_branch
      %1954 = sbr.rel (%p1952) target = $region56
    $region55: #{network_forward.1} parent=5 // pred_region
      %s1955 = ssub.s32 %s13, 2
      // Predicated region
      $region57: #{network_forward.1} parent=55 // pred_check
        %p1956 = pneg %p194
      $region58: #{network_forward.1} parent=55 // pred_check_branch
        %1958 = sbr.rel (%p1956) target = $region60
      $region59: #{network_forward.1} parent=55 // pred_region
        %s1959 = smul.u32 64, %s19
        %p1960 = scmp.lt.s32.totalorder %s1959, 255
        %s1961 = scalar_select %p1960, %s1959, 255
        %s1962 = smul.addr %s1961, 8
        %s1963 = scalar_lea.vmem %s7, %s1962
      $region60: #{network_forward.1} parent=55 // pred_fallthru
        _
    $region56: #{network_forward.1} parent=5 // pred_fallthru
      _
  $region6: #{network_forward.1} parent=0 // loop_footer
    %s17 = sadd.s32 1, %s13
  $region7: #{network_forward.1} parent=0 // loop_footer_branch
    %12 = sbr.rel target = $region3
  $region8: #{network_forward.1} parent=0 // loop_exit
    _

</llo_original>
